<compile_context>
chip_gen: v7x
topology: tpu7x:2x2x1
jax: 0.10.0
libtpu: 0.0.40
codegen_flags: <defaults>
</compile_context>

<pallas_src>
import jax
import jax.numpy as jnp
from jax.experimental import pallas as pl
from jax.experimental.pallas import tpu as pltpu


# ----------------------------------------------------------------------------
# Network constants (FMNIST ConvSmall)
# ----------------------------------------------------------------------------
_KHW = 4            # conv kernel size (both convs), stride 2
_C1 = 16            # conv1 out channels
_C2 = 32            # conv2 out channels
_H2 = 5             # conv2 output spatial
_T2 = _H2 * _H2     # 25 conv2 output positions
_F1 = 100           # fc1 width
_F2 = 10            # logits
_LANE = 128         # TPU lane width
_NB = 8             # batch tile (sublane-aligned)
_K1 = (_KHW * _KHW) * (_KHW * _KHW)   # 256 = (conv2 offsets) x (conv1 taps)
_KF1 = _T2 * _LANE                    # 3200: fc1 K after lane-concat of 25 blocks
_ROWS = _T2 * _NB                     # 200 patch rows per batch tile


def _round_up(x, m):
    return ((x + m - 1) // m) * m


# ----------------------------------------------------------------------------
# Fused Pallas kernel: conv1 -> conv2 -> fc1 -> fc2, all resident in VMEM.
# One grid step == one batch tile of 8 samples.
# ----------------------------------------------------------------------------
def _fused_forward_kernel(p_ref, w1_ref, w2_ref, wf1_ref, wf2_ref, b_ref, out_ref):
    f32 = jnp.float32
    b1 = b_ref[0:1, :]            # (1, 256) conv1 bias tiled over the 16 offsets
    b2 = b_ref[1:2, :_LANE]       # (1, 128)
    b3 = b_ref[2:3, :_LANE]       # (1, 128)
    b4 = b_ref[3:4, :_LANE]       # (1, 128)

    # conv1 as ONE wide-K matmul against a block-diagonal weight.  The output
    # is exactly conv2's im2col patch matrix: rows = (t=(h2,w2), n-in-tile),
    # lanes = (conv2 offset k=(i,j), conv1 out channel).
    p2 = jnp.maximum(
        jnp.dot(p_ref[...], w1_ref[...], preferred_element_type=f32) + b1,
        0.0)                                                     # (200, 256)

    # conv2: single K=256 matmul (matches the 256-wide MXU on v6e/v7x).
    act2 = jnp.maximum(
        jnp.dot(p2, w2_ref[...], preferred_element_type=f32) + b2,
        0.0)                                                     # (200, 128)

    # fc1: the NCHW flatten is folded into wf1's layout.  The 25 spatial blocks
    # of act2 are whole (8,128) vregs, so the lane-concat is a free relayout;
    # fc1 becomes ONE K=3200 matmul instead of a 25-deep accumulate chain.
    a = jnp.concatenate(
        [act2[t * _NB:(t + 1) * _NB, :] for t in range(_T2)], axis=-1)  # (8, 3200)
    h = jnp.maximum(
        jnp.dot(a, wf1_ref[...], preferred_element_type=f32) + b3,
        0.0)                                                     # (8, 128)

    # fc2: logits slab; valid region [:, :10].
    out_ref[...] = jnp.dot(h, wf2_ref[...], preferred_element_type=f32) + b4


# ----------------------------------------------------------------------------
# Plain-JAX glue: fused im2col of the raw input (pure data rearrangement).
# Column (k*16 + m) with k=i*4+j (conv2 offset), m=ki*4+kj (conv1 tap) holds
#   x[n, 0, 4*h2 + 2*i + ki, 4*w2 + 2*j + kj]
# Rows are ordered (batch tile, t = h2*5+w2, n within tile).
# ----------------------------------------------------------------------------
def _im2col_fused(x, n_pad):
    n = x.shape[0]
    span = 4 * (_H2 - 1) + 1                       # 17 -> 5 samples, stride 4
    cols = []
    for i in range(_KHW):
        for j in range(_KHW):
            for ki in range(_KHW):
                for kj in range(_KHW):
                    r0 = 2 * i + ki
                    c0 = 2 * j + kj
                    cols.append(x[:, 0, r0:r0 + span:4, c0:c0 + span:4])  # (N,5,5)
    p = jnp.stack(cols, axis=-1).reshape(n, _T2, _K1)          # (N, 25, 256)
    p = jnp.pad(p, ((0, n_pad - n), (0, 0), (0, 0)))
    p = p.reshape(n_pad // _NB, _NB, _T2, _K1).transpose(0, 2, 1, 3)
    return p.reshape(n_pad * _T2, _K1)


# ----------------------------------------------------------------------------
# One-time parameter preparation (hoisted out of the per-call jit path).
# ----------------------------------------------------------------------------
def prepare_params(params):
    f32 = jnp.float32
    w1, b1 = params["conv1"]      # (16,1,4,4), (16,)
    w2, b2 = params["conv2"]      # (32,16,4,4), (32,)
    wf1, bf1 = params["fc1"]      # (100,800), (100,)
    wf2, bf2 = params["fc2"]      # (10,100), (10,)
    kk = _KHW * _KHW

    # conv1: (Cout,1,kh,kw) -> (taps, Cout), replicated block-diagonally so one
    # K=256 matmul produces conv2's patch matrix directly.
    w1_flat = w1.reshape(_C1, kk).T.astype(f32)                # (16 taps, 16 cout)
    w1_wide = jnp.kron(jnp.eye(kk, dtype=f32), w1_flat)        # (256, 256)

    # conv2: [k=(i,j), cin] -> cout, padded to 128 output lanes.
    w2_slab = jnp.zeros((_K1, _LANE), f32).at[:, :_C2].set(
        jnp.transpose(w2, (2, 3, 1, 0)).reshape(_K1, _C2).astype(f32))

    # fc1: PyTorch flatten index c*25 + t folded into a (25*128, 128) slab
    # whose row t*128 + c matches the in-kernel lane-concat layout.
    wf1r = jnp.transpose(wf1.reshape(_F1, _C2, _T2), (2, 1, 0)).astype(f32)  # (25,32,100)
    wf1_slab = jnp.zeros((_T2, _LANE, _LANE), f32).at[:, :_C2, :_F1].set(wf1r)
    wf1_slab = wf1_slab.reshape(_KF1, _LANE)

    # fc2: (F2, F1) -> (F1, F2), padded to (128, 128).
    wf2_slab = jnp.zeros((_LANE, _LANE), f32).at[:_F1, :_F2].set(wf2.T.astype(f32))

    # Coalesced biases: one (8, 256) slab (single small DMA).
    bias = (jnp.zeros((8, _K1), f32)
            .at[0, :].set(jnp.tile(b1.astype(f32), kk))
            .at[1, :_C2].set(b2.astype(f32))
            .at[2, :_F1].set(bf1.astype(f32))
            .at[3, :_F2].set(bf2.astype(f32)))

    return w1_wide, w2_slab, wf1_slab, wf2_slab, bias


# ----------------------------------------------------------------------------
# Top.forward(x) == net(x)
# ----------------------------------------------------------------------------
def _top_forward_impl(prepared, x):
    """x: (N, 1, 28, 28) float32 NCHW -> logits (N, 10)."""
    w1_wide, w2_slab, wf1_slab, wf2_slab, bias = prepared
    n = x.shape[0]
    n_pad = _round_up(n, _NB)
    n_tiles = n_pad // _NB

    p1 = _im2col_fused(x.astype(jnp.float32), n_pad)           # (n_pad*25, 256)

    flops = 2 * n_tiles * (_ROWS * _K1 * _K1 + _ROWS * _K1 * _LANE
                           + _NB * _KF1 * _LANE + _NB * _LANE * _LANE)
    bytes_accessed = 4 * (n_pad * _T2 * _K1 + _K1 * _K1 + _K1 * _LANE
                          + _KF1 * _LANE + _LANE * _LANE + 8 * _K1
                          + n_pad * _LANE)

    out = pl.pallas_call(
        _fused_forward_kernel,
        out_shape=jax.ShapeDtypeStruct((n_pad, _LANE), jnp.float32),
        grid=(n_tiles,),
        in_specs=[
            pl.BlockSpec((_ROWS, _K1), lambda b: (b, 0)),      # batch-tiled patches
            pl.BlockSpec((_K1, _K1), lambda b: (0, 0)),        # conv1 block-diag weight
            pl.BlockSpec((_K1, _LANE), lambda b: (0, 0)),      # conv2 weight
            pl.BlockSpec((_KF1, _LANE), lambda b: (0, 0)),     # fc1 weight (flatten folded)
            pl.BlockSpec((_LANE, _LANE), lambda b: (0, 0)),    # fc2 weight
            pl.BlockSpec((8, _K1), lambda b: (0, 0)),          # coalesced biases
        ],
        out_specs=pl.BlockSpec((_NB, _LANE), lambda b: (b, 0)),
        compiler_params=pltpu.CompilerParams(
            dimension_semantics=("parallel",),
            vmem_limit_bytes=32 * 1024 * 1024,   # ~5 MB actually used; safe on v5e/v6e/v7x
        ),
        cost_estimate=pl.CostEstimate(
            flops=flops, transcendentals=0, bytes_accessed=bytes_accessed),
    )(p1, w1_wide, w2_slab, wf1_slab, wf2_slab, bias)

    return out[:n, :_F2]


top_forward = jax.jit(_top_forward_impl)


# ----------------------------------------------------------------------------
# Parameter init (Kaiming-uniform-like, per PyTorch defaults)
# ----------------------------------------------------------------------------
def _init_conv(key, cout, cin, kh, kw):
    kw_, kb_ = jax.random.split(key)
    bound = 1.0 / jnp.sqrt(cin * kh * kw)
    w = jax.random.uniform(kw_, (cout, cin, kh, kw), jnp.float32, -bound, bound)
    b = jax.random.uniform(kb_, (cout,), jnp.float32, -bound, bound)
    return w, b


def _init_linear(key, cout, cin):
    kw_, kb_ = jax.random.split(key)
    bound = 1.0 / jnp.sqrt(cin)
    w = jax.random.uniform(kw_, (cout, cin), jnp.float32, -bound, bound)
    b = jax.random.uniform(kb_, (cout,), jnp.float32, -bound, bound)
    return w, b


def init_params(key):
    k1, k2, k3, k4 = jax.random.split(key, 4)
    return {
        "conv1": _init_conv(k1, _C1, 1, _KHW, _KHW),
        "conv2": _init_conv(k2, _C2, _C1, _KHW, _KHW),
        "fc1": _init_linear(k3, _F1, _C2 * _T2),
        "fc2": _init_linear(k4, _F2, _F1),
    }


# ----------------------------------------------------------------------------
# Pure-JAX reference (sanity check)
# ----------------------------------------------------------------------------
def _reference_forward(params, x):
    w1, b1 = params["conv1"]
    w2, b2 = params["conv2"]
    wf1, bf1 = params["fc1"]
    wf2, bf2 = params["fc2"]
    dn = ("NCHW", "OIHW", "NCHW")
    h = jax.lax.conv_general_dilated(x, w1, (2, 2), "VALID", dimension_numbers=dn)
    h = jax.nn.relu(h + b1[None, :, None, None])
    h = jax.lax.conv_general_dilated(h, w2, (2, 2), "VALID", dimension_numbers=dn)
    h = jax.nn.relu(h + b2[None, :, None, None])
    h = h.reshape(h.shape[0], -1)
    h = jax.nn.relu(h @ wf1.T + bf1)
    return h @ wf2.T + bf2


if __name__ == "__main__":
    key = jax.random.PRNGKey(0)
    kx, kp = jax.random.split(key)

    # FMNIST-shaped input, small batch.
    x = jax.random.normal(kx, (2, 1, 28, 28), dtype=jnp.float32)
    params = init_params(kp)

    prepared = prepare_params(params)     # one-time padding/permutation
    out = top_forward(prepared, x)
    out = jax.block_until_ready(out)

    assert out.shape == (2, 10), out.shape
    assert out.dtype == jnp.float32
    assert bool(jnp.all(jnp.isfinite(out)))

    ref = _reference_forward(params, x)
    max_err = float(jnp.max(jnp.abs(out - ref)))
    assert max_err < 1e-3, f"mismatch vs reference: max_err={max_err}"

    print("KERNEL_OK")
</pallas_src>

<mosaic_0001>
module attributes {stable_mosaic.version = 11 : i64} {
  func.func @_fused_forward_kernel(%arg0: i32, %arg1: memref<200x256xf32, #tpu.memory_space<vmem>>, %arg2: memref<256x256xf32, #tpu.memory_space<vmem>>, %arg3: memref<256x128xf32, #tpu.memory_space<vmem>>, %arg4: memref<3200x128xf32, #tpu.memory_space<vmem>>, %arg5: memref<128x128xf32, #tpu.memory_space<vmem>>, %arg6: memref<8x256xf32, #tpu.memory_space<vmem>>, %arg7: memref<8x128xf32, #tpu.memory_space<vmem>>) attributes {dimension_semantics = [#tpu.dimension_semantics<parallel>], iteration_bounds = array<i64: 1>, scalar_prefetch = 0 : i64, scratch_operands = 0 : i64, tpu.core_type = #tpu.core_type<tc>, window_params = [{transform_indices = @transform_0, window_bounds = array<i64: 200, 256>}, {pipeline_mode = #tpu.pipeline_mode<synchronous>, transform_indices = @transform_1, window_bounds = array<i64: 256, 256>}, {pipeline_mode = #tpu.pipeline_mode<synchronous>, transform_indices = @transform_2, window_bounds = array<i64: 256, 128>}, {pipeline_mode = #tpu.pipeline_mode<synchronous>, transform_indices = @transform_3, window_bounds = array<i64: 3200, 128>}, {pipeline_mode = #tpu.pipeline_mode<synchronous>, transform_indices = @transform_4, window_bounds = array<i64: 128, 128>}, {pipeline_mode = #tpu.pipeline_mode<synchronous>, transform_indices = @transform_5, window_bounds = array<i64: 8, 256>}, {transform_indices = @transform_6, window_bounds = array<i64: 8, 128>}]} {
    %c0 = arith.constant 0 : index
    %c0_0 = arith.constant 0 : index
    %0 = vector.load %arg6[%c0, %c0_0] : memref<8x256xf32, #tpu.memory_space<vmem>>, vector<1x256xf32>
    %c1 = arith.constant 1 : index
    %c0_1 = arith.constant 0 : index
    %1 = vector.load %arg6[%c1, %c0_1] : memref<8x256xf32, #tpu.memory_space<vmem>>, vector<1x128xf32>
    %c2 = arith.constant 2 : index
    %c0_2 = arith.constant 0 : index
    %2 = vector.load %arg6[%c2, %c0_2] : memref<8x256xf32, #tpu.memory_space<vmem>>, vector<1x128xf32>
    %c3 = arith.constant 3 : index
    %c0_3 = arith.constant 0 : index
    %3 = vector.load %arg6[%c3, %c0_3] : memref<8x256xf32, #tpu.memory_space<vmem>>, vector<1x128xf32>
    %c0_4 = arith.constant 0 : index
    %c0_5 = arith.constant 0 : index
    %4 = vector.load %arg1[%c0_4, %c0_5] : memref<200x256xf32, #tpu.memory_space<vmem>>, vector<200x256xf32>
    %c0_6 = arith.constant 0 : index
    %c0_7 = arith.constant 0 : index
    %5 = vector.load %arg2[%c0_6, %c0_7] : memref<256x256xf32, #tpu.memory_space<vmem>>, vector<256x256xf32>
    %cst = arith.constant dense<0.000000e+00> : vector<200x256xf32>
    %6 = tpu.matmul %4, %5, %cst {dimension_numbers = #tpu.dot_dimension_numbers<[1], [0], [0], [1], [0, 0, 1, 1], [], []>} : vector<200x256xf32>, vector<256x256xf32>, vector<200x256xf32> -> vector<200x256xf32>
    %7 = vector.broadcast %0 : vector<1x256xf32> to vector<200x256xf32>
    %8 = arith.addf %6, %7 : vector<200x256xf32>
    %cst_8 = arith.constant 0.000000e+00 : f32
    %9 = vector.broadcast %cst_8 : f32 to vector<200x256xf32>
    %10 = arith.maximumf %8, %9 : vector<200x256xf32>
    %c0_9 = arith.constant 0 : index
    %c0_10 = arith.constant 0 : index
    %11 = vector.load %arg3[%c0_9, %c0_10] : memref<256x128xf32, #tpu.memory_space<vmem>>, vector<256x128xf32>
    %cst_11 = arith.constant dense<0.000000e+00> : vector<200x128xf32>
    %12 = tpu.matmul %10, %11, %cst_11 {dimension_numbers = #tpu.dot_dimension_numbers<[1], [0], [0], [1], [0, 0, 1, 1], [], []>} : vector<200x256xf32>, vector<256x128xf32>, vector<200x128xf32> -> vector<200x128xf32>
    %13 = vector.broadcast %1 : vector<1x128xf32> to vector<200x128xf32>
    %14 = arith.addf %12, %13 : vector<200x128xf32>
    %cst_12 = arith.constant 0.000000e+00 : f32
    %15 = vector.broadcast %cst_12 : f32 to vector<200x128xf32>
    %16 = arith.maximumf %14, %15 : vector<200x128xf32>
    %17 = vector.extract_strided_slice %16 {offsets = [0, 0], sizes = [8, 128], strides = [1, 1]} : vector<200x128xf32> to vector<8x128xf32>
    %18 = vector.extract_strided_slice %16 {offsets = [8, 0], sizes = [8, 128], strides = [1, 1]} : vector<200x128xf32> to vector<8x128xf32>
    %19 = vector.extract_strided_slice %16 {offsets = [16, 0], sizes = [8, 128], strides = [1, 1]} : vector<200x128xf32> to vector<8x128xf32>
    %20 = vector.extract_strided_slice %16 {offsets = [24, 0], sizes = [8, 128], strides = [1, 1]} : vector<200x128xf32> to vector<8x128xf32>
    %21 = vector.extract_strided_slice %16 {offsets = [32, 0], sizes = [8, 128], strides = [1, 1]} : vector<200x128xf32> to vector<8x128xf32>
    %22 = vector.extract_strided_slice %16 {offsets = [40, 0], sizes = [8, 128], strides = [1, 1]} : vector<200x128xf32> to vector<8x128xf32>
    %23 = vector.extract_strided_slice %16 {offsets = [48, 0], sizes = [8, 128], strides = [1, 1]} : vector<200x128xf32> to vector<8x128xf32>
    %24 = vector.extract_strided_slice %16 {offsets = [56, 0], sizes = [8, 128], strides = [1, 1]} : vector<200x128xf32> to vector<8x128xf32>
    %25 = vector.extract_strided_slice %16 {offsets = [64, 0], sizes = [8, 128], strides = [1, 1]} : vector<200x128xf32> to vector<8x128xf32>
    %26 = vector.extract_strided_slice %16 {offsets = [72, 0], sizes = [8, 128], strides = [1, 1]} : vector<200x128xf32> to vector<8x128xf32>
    %27 = vector.extract_strided_slice %16 {offsets = [80, 0], sizes = [8, 128], strides = [1, 1]} : vector<200x128xf32> to vector<8x128xf32>
    %28 = vector.extract_strided_slice %16 {offsets = [88, 0], sizes = [8, 128], strides = [1, 1]} : vector<200x128xf32> to vector<8x128xf32>
    %29 = vector.extract_strided_slice %16 {offsets = [96, 0], sizes = [8, 128], strides = [1, 1]} : vector<200x128xf32> to vector<8x128xf32>
    %30 = vector.extract_strided_slice %16 {offsets = [104, 0], sizes = [8, 128], strides = [1, 1]} : vector<200x128xf32> to vector<8x128xf32>
    %31 = vector.extract_strided_slice %16 {offsets = [112, 0], sizes = [8, 128], strides = [1, 1]} : vector<200x128xf32> to vector<8x128xf32>
    %32 = vector.extract_strided_slice %16 {offsets = [120, 0], sizes = [8, 128], strides = [1, 1]} : vector<200x128xf32> to vector<8x128xf32>
    %33 = vector.extract_strided_slice %16 {offsets = [128, 0], sizes = [8, 128], strides = [1, 1]} : vector<200x128xf32> to vector<8x128xf32>
    %34 = vector.extract_strided_slice %16 {offsets = [136, 0], sizes = [8, 128], strides = [1, 1]} : vector<200x128xf32> to vector<8x128xf32>
    %35 = vector.extract_strided_slice %16 {offsets = [144, 0], sizes = [8, 128], strides = [1, 1]} : vector<200x128xf32> to vector<8x128xf32>
    %36 = vector.extract_strided_slice %16 {offsets = [152, 0], sizes = [8, 128], strides = [1, 1]} : vector<200x128xf32> to vector<8x128xf32>
    %37 = vector.extract_strided_slice %16 {offsets = [160, 0], sizes = [8, 128], strides = [1, 1]} : vector<200x128xf32> to vector<8x128xf32>
    %38 = vector.extract_strided_slice %16 {offsets = [168, 0], sizes = [8, 128], strides = [1, 1]} : vector<200x128xf32> to vector<8x128xf32>
    %39 = vector.extract_strided_slice %16 {offsets = [176, 0], sizes = [8, 128], strides = [1, 1]} : vector<200x128xf32> to vector<8x128xf32>
    %40 = vector.extract_strided_slice %16 {offsets = [184, 0], sizes = [8, 128], strides = [1, 1]} : vector<200x128xf32> to vector<8x128xf32>
    %41 = vector.extract_strided_slice %16 {offsets = [192, 0], sizes = [8, 128], strides = [1, 1]} : vector<200x128xf32> to vector<8x128xf32>
    %42 = tpu.concatenate %17, %18, %19, %20, %21, %22, %23, %24, %25, %26, %27, %28, %29, %30, %31, %32 in 1 : vector<8x128xf32>, vector<8x128xf32>, vector<8x128xf32>, vector<8x128xf32>, vector<8x128xf32>, vector<8x128xf32>, vector<8x128xf32>, vector<8x128xf32>, vector<8x128xf32>, vector<8x128xf32>, vector<8x128xf32>, vector<8x128xf32>, vector<8x128xf32>, vector<8x128xf32>, vector<8x128xf32>, vector<8x128xf32> -> vector<8x2048xf32>
    %43 = tpu.concatenate %33, %34, %35, %36, %37, %38, %39, %40, %41 in 1 : vector<8x128xf32>, vector<8x128xf32>, vector<8x128xf32>, vector<8x128xf32>, vector<8x128xf32>, vector<8x128xf32>, vector<8x128xf32>, vector<8x128xf32>, vector<8x128xf32> -> vector<8x1152xf32>
    %44 = tpu.concatenate %42, %43 in 1 : vector<8x2048xf32>, vector<8x1152xf32> -> vector<8x3200xf32>
    %c0_13 = arith.constant 0 : index
    %c0_14 = arith.constant 0 : index
    %45 = vector.load %arg4[%c0_13, %c0_14] : memref<3200x128xf32, #tpu.memory_space<vmem>>, vector<3200x128xf32>
    %cst_15 = arith.constant dense<0.000000e+00> : vector<8x128xf32>
    %46 = tpu.matmul %44, %45, %cst_15 {dimension_numbers = #tpu.dot_dimension_numbers<[1], [0], [0], [1], [0, 0, 1, 1], [], []>} : vector<8x3200xf32>, vector<3200x128xf32>, vector<8x128xf32> -> vector<8x128xf32>
    %47 = vector.broadcast %2 : vector<1x128xf32> to vector<8x128xf32>
    %48 = arith.addf %46, %47 : vector<8x128xf32>
    %cst_16 = arith.constant 0.000000e+00 : f32
    %49 = vector.broadcast %cst_16 : f32 to vector<8x128xf32>
    %50 = arith.maximumf %48, %49 : vector<8x128xf32>
    %c0_17 = arith.constant 0 : index
    %c0_18 = arith.constant 0 : index
    %51 = vector.load %arg5[%c0_17, %c0_18] : memref<128x128xf32, #tpu.memory_space<vmem>>, vector<128x128xf32>
    %cst_19 = arith.constant dense<0.000000e+00> : vector<8x128xf32>
    %52 = tpu.matmul %50, %51, %cst_19 {dimension_numbers = #tpu.dot_dimension_numbers<[1], [0], [0], [1], [0, 0, 1, 1], [], []>} : vector<8x128xf32>, vector<128x128xf32>, vector<8x128xf32> -> vector<8x128xf32>
    %53 = vector.broadcast %3 : vector<1x128xf32> to vector<8x128xf32>
    %54 = arith.addf %52, %53 : vector<8x128xf32>
    %c0_20 = arith.constant 0 : index
    %c0_21 = arith.constant 0 : index
    %55 = vector.load %arg7[%c0_20, %c0_21] : memref<8x128xf32, #tpu.memory_space<vmem>>, vector<8x128xf32>
    tpu.vector_store %arg7[%c0_20, %c0_21], %54 {strides = array<i32>} : memref<8x128xf32, #tpu.memory_space<vmem>>, vector<8x128xf32>,
    return
  }
  func.func @transform_0(%arg0: i32) -> (i32, i32) {
    %c0_i32 = arith.constant 0 : i32
    %c0_i32_0 = arith.constant 0 : i32
    return %arg0, %c0_i32 : i32, i32
  }
  func.func @transform_1(%arg0: i32) -> (i32, i32) {
    %c0_i32 = arith.constant 0 : i32
    %c0_i32_0 = arith.constant 0 : i32
    %c0_i32_1 = arith.constant 0 : i32
    return %c0_i32, %c0_i32_0 : i32, i32
  }
  func.func @transform_2(%arg0: i32) -> (i32, i32) {
    %c0_i32 = arith.constant 0 : i32
    %c0_i32_0 = arith.constant 0 : i32
    %c0_i32_1 = arith.constant 0 : i32
    return %c0_i32, %c0_i32_0 : i32, i32
  }
  func.func @transform_3(%arg0: i32) -> (i32, i32) {
    %c0_i32 = arith.constant 0 : i32
    %c0_i32_0 = arith.constant 0 : i32
    %c0_i32_1 = arith.constant 0 : i32
    return %c0_i32, %c0_i32_0 : i32, i32
  }
  func.func @transform_4(%arg0: i32) -> (i32, i32) {
    %c0_i32 = arith.constant 0 : i32
    %c0_i32_0 = arith.constant 0 : i32
    %c0_i32_1 = arith.constant 0 : i32
    return %c0_i32, %c0_i32_0 : i32, i32
  }
  func.func @transform_5(%arg0: i32) -> (i32, i32) {
    %c0_i32 = arith.constant 0 : i32
    %c0_i32_0 = arith.constant 0 : i32
    %c0_i32_1 = arith.constant 0 : i32
    return %c0_i32, %c0_i32_0 : i32, i32
  }
  func.func @transform_6(%arg0: i32) -> (i32, i32) {
    %c0_i32 = arith.constant 0 : i32
    %c0_i32_0 = arith.constant 0 : i32
    return %arg0, %c0_i32 : i32, i32
  }
}

</mosaic_0001>

<llo_original>
// kernel: _top_forward_impl.1
$region0: #{_top_forward_impl.1}
  #allocation0 [shape = 'u32[]', space=smem, size = 0x4, offset = 0x4, fixed_abs, tag = 'smem constant byte address 0x4 - core index']
  #allocation1 [shape = 'u32[144,128]{1,0:T(1,128)}', space=vmem, size = 0x12000, scoped, tag = 'internal scratch']
  %s0 = inlined_call_operand.vmem [shape: f32[200,256], index: 0, kind: input, shape index: {}]
  %s1 = inlined_call_operand.vmem [shape: f32[256,256], index: 1, kind: input, shape index: {}]
  %s2 = inlined_call_operand.vmem [shape: f32[256,128], index: 2, kind: input, shape index: {}]
  %s3 = inlined_call_operand.vmem [shape: f32[3200,128], index: 3, kind: input, shape index: {}]
  %s4 = inlined_call_operand.vmem [shape: f32[128,128], index: 4, kind: input, shape index: {}]
  %s5 = inlined_call_operand.vmem [shape: f32[8,256], index: 5, kind: input, shape index: {}]
  %s6 = inlined_call_operand.vmem [shape: f32[8,128], index: 6, kind: output, shape index: {}]
  %s7 = sld [smem:[#allocation0]]
  $region34: #{_top_forward_impl.1} parent=0
    _
  %s9 = ssub.s32 1, %s7
  %s10 = scalar_select 0, %s9, %s7
  // Predicated region
  $region2: #{_top_forward_impl.1} parent=0 // pred_check
    _
  $region3: #{_top_forward_impl.1} parent=0 // pred_check_branch
    %12 = sbr.rel (0) target = $region5
  $region4: #{_top_forward_impl.1} parent=0 // pred_region
    _
  $region5: #{_top_forward_impl.1} parent=0 // pred_fallthru
    _
  // Predicated region
  $region6: #{_top_forward_impl.1} parent=0 // pred_check
    _
  $region7: #{_top_forward_impl.1} parent=0 // pred_check_branch
    %14 = sbr.rel (0) target = $region9
  $region8: #{_top_forward_impl.1} parent=0 // pred_region
    _
  $region9: #{_top_forward_impl.1} parent=0 // pred_fallthru
    _
  // Predicated region
  $region10: #{_top_forward_impl.1} parent=0 // pred_check
    _
  $region11: #{_top_forward_impl.1} parent=0 // pred_check_branch
    %16 = sbr.rel (0) target = $region13
  $region12: #{_top_forward_impl.1} parent=0 // pred_region
    _
  $region13: #{_top_forward_impl.1} parent=0 // pred_fallthru
    _
  // Predicated region
  $region14: #{_top_forward_impl.1} parent=0 // pred_check
    _
  $region15: #{_top_forward_impl.1} parent=0 // pred_check_branch
    %18 = sbr.rel (0) target = $region17
  $region16: #{_top_forward_impl.1} parent=0 // pred_region
    _
  $region17: #{_top_forward_impl.1} parent=0 // pred_fallthru
    _
  // Predicated region
  $region18: #{_top_forward_impl.1} parent=0 // pred_check
    _
  $region19: #{_top_forward_impl.1} parent=0 // pred_check_branch
    %20 = sbr.rel (0) target = $region21
  $region20: #{_top_forward_impl.1} parent=0 // pred_region
    _
  $region21: #{_top_forward_impl.1} parent=0 // pred_fallthru
    _
  // Predicated region
  $region22: #{_top_forward_impl.1} parent=0 // pred_check
    _
  $region23: #{_top_forward_impl.1} parent=0 // pred_check_branch
    %22 = sbr.rel (0) target = $region25
  $region24: #{_top_forward_impl.1} parent=0 // pred_region
    _
  $region25: #{_top_forward_impl.1} parent=0 // pred_fallthru
    _
  %v23 = vld [vmem:[%s5] ss:$8 sm:$0x3]
  %v24 = vld [vmem:[%s5 + $0x1] ss:$0 sm:$0xff]
  %v25 = vld [vmem:[%s5 + $0x2] ss:$0 sm:$0xff]
  %v26 = vld [vmem:[%s5 + $0x3] ss:$0 sm:$0xff]
  %v27 = vld [vmem:[%s0] sm:$0xff]
  %v28 = vld [vmem:[%s0 + $0x8] sm:$0xff]
  %v29 = vld [vmem:[%s0 + $0x10] sm:$0xff]
  %v30 = vld [vmem:[%s0 + $0x18] sm:$0xff]
  %v31 = vld [vmem:[%s0 + $0x20] sm:$0xff]
  %v32 = vld [vmem:[%s0 + $0x28] sm:$0xff]
  %v33 = vld [vmem:[%s0 + $0x30] sm:$0xff]
  %v34 = vld [vmem:[%s0 + $0x38] sm:$0xff]
  %v35 = vld [vmem:[%s0 + $0x40] sm:$0xff]
  %v36 = vld [vmem:[%s0 + $0x48] sm:$0xff]
  %v37 = vld [vmem:[%s0 + $0x50] sm:$0xff]
  %v38 = vld [vmem:[%s0 + $0x58] sm:$0xff]
  %v39 = vld [vmem:[%s0 + $0x60] sm:$0xff]
  %v40 = vld [vmem:[%s0 + $0x68] sm:$0xff]
  %v41 = vld [vmem:[%s0 + $0x70] sm:$0xff]
  %v42 = vld [vmem:[%s0 + $0x78] sm:$0xff]
  %v43 = vld [vmem:[%s0 + $0x80] sm:$0xff]
  %v44 = vld [vmem:[%s0 + $0x88] sm:$0xff]
  %v45 = vld [vmem:[%s0 + $0x90] sm:$0xff]
  %v46 = vld [vmem:[%s0 + $0x98] sm:$0xff]
  %v47 = vld [vmem:[%s0 + $0xa0] sm:$0xff]
  %v48 = vld [vmem:[%s0 + $0xa8] sm:$0xff]
  %v49 = vld [vmem:[%s0 + $0xb0] sm:$0xff]
  %v50 = vld [vmem:[%s0 + $0xb8] sm:$0xff]
  %v51 = vld [vmem:[%s0 + $0xc0] sm:$0xff]
  %v52 = vld [vmem:[%s0 + $0xc8] sm:$0xff]
  %v53 = vld [vmem:[%s0 + $0xd0] sm:$0xff]
  %v54 = vld [vmem:[%s0 + $0xd8] sm:$0xff]
  %v55 = vld [vmem:[%s0 + $0xe0] sm:$0xff]
  %v56 = vld [vmem:[%s0 + $0xe8] sm:$0xff]
  %v57 = vld [vmem:[%s0 + $0xf0] sm:$0xff]
  %v58 = vld [vmem:[%s0 + $0xf8] sm:$0xff]
  %v59 = vld [vmem:[%s0 + $0x100] sm:$0xff]
  %v60 = vld [vmem:[%s0 + $0x108] sm:$0xff]
  %v61 = vld [vmem:[%s0 + $0x110] sm:$0xff]
  %v62 = vld [vmem:[%s0 + $0x118] sm:$0xff]
  %v63 = vld [vmem:[%s0 + $0x120] sm:$0xff]
  %v64 = vld [vmem:[%s0 + $0x128] sm:$0xff]
  %v65 = vld [vmem:[%s0 + $0x130] sm:$0xff]
  %v66 = vld [vmem:[%s0 + $0x138] sm:$0xff]
  %v67 = vld [vmem:[%s0 + $0x140] sm:$0xff]
  %v68 = vld [vmem:[%s0 + $0x148] sm:$0xff]
  %v69 = vld [vmem:[%s0 + $0x150] sm:$0xff]
  %v70 = vld [vmem:[%s0 + $0x158] sm:$0xff]
  %v71 = vld [vmem:[%s0 + $0x160] sm:$0xff]
  %v72 = vld [vmem:[%s0 + $0x168] sm:$0xff]
  %v73 = vld [vmem:[%s0 + $0x170] sm:$0xff]
  %v74 = vld [vmem:[%s0 + $0x178] sm:$0xff]
  %v75 = vld [vmem:[%s0 + $0x180] sm:$0xff]
  %v76 = vld [vmem:[%s0 + $0x188] sm:$0xff]
  %v77 = vld [vmem:[%s1] sm:$0xff]
  %v78 = vld [vmem:[%s1 + $0x8] sm:$0xff]
  %v79 = vld [vmem:[%s1 + $0x10] sm:$0xff]
  %v80 = vld [vmem:[%s1 + $0x18] sm:$0xff]
  %v81 = vld [vmem:[%s1 + $0x20] sm:$0xff]
  %v82 = vld [vmem:[%s1 + $0x28] sm:$0xff]
  %v83 = vld [vmem:[%s1 + $0x30] sm:$0xff]
  %v84 = vld [vmem:[%s1 + $0x38] sm:$0xff]
  %v85 = vld [vmem:[%s1 + $0x40] sm:$0xff]
  %v86 = vld [vmem:[%s1 + $0x48] sm:$0xff]
  %v87 = vld [vmem:[%s1 + $0x50] sm:$0xff]
  %v88 = vld [vmem:[%s1 + $0x58] sm:$0xff]
  %v89 = vld [vmem:[%s1 + $0x60] sm:$0xff]
  %v90 = vld [vmem:[%s1 + $0x68] sm:$0xff]
  %v91 = vld [vmem:[%s1 + $0x70] sm:$0xff]
  %v92 = vld [vmem:[%s1 + $0x78] sm:$0xff]
  %v93 = vld [vmem:[%s1 + $0x80] sm:$0xff]
  %v94 = vld [vmem:[%s1 + $0x88] sm:$0xff]
  %v95 = vld [vmem:[%s1 + $0x90] sm:$0xff]
  %v96 = vld [vmem:[%s1 + $0x98] sm:$0xff]
  %v97 = vld [vmem:[%s1 + $0xa0] sm:$0xff]
  %v98 = vld [vmem:[%s1 + $0xa8] sm:$0xff]
  %v99 = vld [vmem:[%s1 + $0xb0] sm:$0xff]
  %v100 = vld [vmem:[%s1 + $0xb8] sm:$0xff]
  %v101 = vld [vmem:[%s1 + $0xc0] sm:$0xff]
  %v102 = vld [vmem:[%s1 + $0xc8] sm:$0xff]
  %v103 = vld [vmem:[%s1 + $0xd0] sm:$0xff]
  %v104 = vld [vmem:[%s1 + $0xd8] sm:$0xff]
  %v105 = vld [vmem:[%s1 + $0xe0] sm:$0xff]
  %v106 = vld [vmem:[%s1 + $0xe8] sm:$0xff]
  %v107 = vld [vmem:[%s1 + $0xf0] sm:$0xff]
  %v108 = vld [vmem:[%s1 + $0xf8] sm:$0xff]
  %v109 = vld [vmem:[%s1 + $0x100] sm:$0xff]
  %v110 = vld [vmem:[%s1 + $0x108] sm:$0xff]
  %v111 = vld [vmem:[%s1 + $0x110] sm:$0xff]
  %v112 = vld [vmem:[%s1 + $0x118] sm:$0xff]
  %v113 = vld [vmem:[%s1 + $0x120] sm:$0xff]
  %v114 = vld [vmem:[%s1 + $0x128] sm:$0xff]
  %v115 = vld [vmem:[%s1 + $0x130] sm:$0xff]
  %v116 = vld [vmem:[%s1 + $0x138] sm:$0xff]
  %v117 = vld [vmem:[%s1 + $0x140] sm:$0xff]
  %v118 = vld [vmem:[%s1 + $0x148] sm:$0xff]
  %v119 = vld [vmem:[%s1 + $0x150] sm:$0xff]
  %v120 = vld [vmem:[%s1 + $0x158] sm:$0xff]
  %v121 = vld [vmem:[%s1 + $0x160] sm:$0xff]
  %v122 = vld [vmem:[%s1 + $0x168] sm:$0xff]
  %v123 = vld [vmem:[%s1 + $0x170] sm:$0xff]
  %v124 = vld [vmem:[%s1 + $0x178] sm:$0xff]
  %v125 = vld [vmem:[%s1 + $0x180] sm:$0xff]
  %v126 = vld [vmem:[%s1 + $0x188] sm:$0xff]
  %v127 = vld [vmem:[%s1 + $0x190] sm:$0xff]
  %v128 = vld [vmem:[%s1 + $0x198] sm:$0xff]
  %v129 = vld [vmem:[%s1 + $0x1a0] sm:$0xff]
  %v130 = vld [vmem:[%s1 + $0x1a8] sm:$0xff]
  %v131 = vld [vmem:[%s1 + $0x1b0] sm:$0xff]
  %v132 = vld [vmem:[%s1 + $0x1b8] sm:$0xff]
  %v133 = vld [vmem:[%s1 + $0x1c0] sm:$0xff]
  %v134 = vld [vmem:[%s1 + $0x1c8] sm:$0xff]
  %v135 = vld [vmem:[%s1 + $0x1d0] sm:$0xff]
  %v136 = vld [vmem:[%s1 + $0x1d8] sm:$0xff]
  %v137 = vld [vmem:[%s1 + $0x1e0] sm:$0xff]
  %v138 = vld [vmem:[%s1 + $0x1e8] sm:$0xff]
  %v139 = vld [vmem:[%s1 + $0x1f0] sm:$0xff]
  %v140 = vld [vmem:[%s1 + $0x1f8] sm:$0xff]
  %v142 = vlaneseq
  %v143 = vshrl.u32 %v142, 7
  %v144 = vsub.s32 0, %v143
  %v145 = vrot.slane %v23, %v144
  %v146 = vlaneseq
  %v147 = vshrl.u32 %v146, 7
  %v148 = vsub.s32 1, %v147
  %v149 = vrot.slane %v23, %v148
  %152 = vmatprep.subr.mxu0 %v78
  %153 = vmatpush1.msra.mxu0 %v77
  %154 = vmatprep.subr.mxu0 %v80
  %155 = vmatpush1.msra.mxu0 %v79
  %156 = vmatprep.subr.mxu0 %v82
  %157 = vmatpush1.msra.mxu0 %v81
  %158 = vmatprep.subr.mxu0 %v84
  %159 = vmatpush1.msra.mxu0 %v83
  %160 = vmatprep.subr.mxu0 %v86
  %161 = vmatpush1.msra.mxu0 %v85
  %162 = vmatprep.subr.mxu0 %v88
  %163 = vmatpush1.msra.mxu0 %v87
  %164 = vmatprep.subr.mxu0 %v90
  %165 = vmatpush1.msra.mxu0 %v89
  %166 = vmatprep.subr.mxu0 %v92
  %167 = vmatpush1.msra.mxu0 %v91
  %168 = vmatprep.subr.mxu0 %v94
  %169 = vmatpush1.msra.mxu0 %v93
  %170 = vmatprep.subr.mxu0 %v96
  %171 = vmatpush1.msra.mxu0 %v95
  %172 = vmatprep.subr.mxu0 %v98
  %173 = vmatpush1.msra.mxu0 %v97
  %174 = vmatprep.subr.mxu0 %v100
  %175 = vmatpush1.msra.mxu0 %v99
  %176 = vmatprep.subr.mxu0 %v102
  %177 = vmatpush1.msra.mxu0 %v101
  %178 = vmatprep.subr.mxu0 %v104
  %179 = vmatpush1.msra.mxu0 %v103
  %180 = vmatprep.subr.mxu0 %v106
  %181 = vmatpush1.msra.mxu0 %v105
  %182 = vmatprep.subr.mxu0 %v108
  %183 = vmatpush1.msra.mxu0 %v107
  %184 = vmatprep.subr.mxu0 %v110
  %185 = vmatpush1.msra.mxu0 %v109
  %186 = vmatprep.subr.mxu0 %v112
  %187 = vmatpush1.msra.mxu0 %v111
  %188 = vmatprep.subr.mxu0 %v114
  %189 = vmatpush1.msra.mxu0 %v113
  %190 = vmatprep.subr.mxu0 %v116
  %191 = vmatpush1.msra.mxu0 %v115
  %192 = vmatprep.subr.mxu0 %v118
  %193 = vmatpush1.msra.mxu0 %v117
  %194 = vmatprep.subr.mxu0 %v120
  %195 = vmatpush1.msra.mxu0 %v119
  %196 = vmatprep.subr.mxu0 %v122
  %197 = vmatpush1.msra.mxu0 %v121
  %198 = vmatprep.subr.mxu0 %v124
  %199 = vmatpush1.msra.mxu0 %v123
  %200 = vmatprep.subr.mxu0 %v126
  %201 = vmatpush1.msra.mxu0 %v125
  %202 = vmatprep.subr.mxu0 %v128
  %203 = vmatpush1.msra.mxu0 %v127
  %204 = vmatprep.subr.mxu0 %v130
  %205 = vmatpush1.msra.mxu0 %v129
  %206 = vmatprep.subr.mxu0 %v132
  %207 = vmatpush1.msra.mxu0 %v131
  %208 = vmatprep.subr.mxu0 %v134
  %209 = vmatpush1.msra.mxu0 %v133
  %210 = vmatprep.subr.mxu0 %v136
  %211 = vmatpush1.msra.mxu0 %v135
  %212 = vmatprep.subr.mxu0 %v138
  %213 = vmatpush1.msra.mxu0 %v137
  %214 = vmatprep.subr.mxu0 %v140
  %215 = vmatpush1.msra.mxu0 %v139
  %216 = vmatprep.mubr.f32.mxu0 %v28
  %217 = vmatmul.mubr.f32.gmra.mrb[0].mxu0 %v27
  %v218 = vpop.f32.mrb[0].mxu0
  %v219 = vadd.f32 %v145, %v218
  %v220 = vpop.f32.mrb[0].mxu0
  %v221 = vadd.f32 %v149, %v220
  %222 = vmatprep.mubr.f32.mxu0 %v30
  %223 = vmatmul.mubr.f32.gmra.mrb[0].mxu0 %v29
  %v224 = vpop.f32.mrb[0].mxu0
  %v225 = vadd.f32 %v145, %v224
  %v226 = vpop.f32.mrb[0].mxu0
  %v227 = vadd.f32 %v149, %v226
  %228 = vmatprep.mubr.f32.mxu0 %v32
  %229 = vmatmul.mubr.f32.gmra.mrb[0].mxu0 %v31
  %v230 = vpop.f32.mrb[0].mxu0
  %v231 = vadd.f32 %v145, %v230
  %v232 = vpop.f32.mrb[0].mxu0
  %v233 = vadd.f32 %v149, %v232
  %234 = vmatprep.mubr.f32.mxu0 %v34
  %235 = vmatmul.mubr.f32.gmra.mrb[0].mxu0 %v33
  %v236 = vpop.f32.mrb[0].mxu0
  %v237 = vadd.f32 %v145, %v236
  %v238 = vpop.f32.mrb[0].mxu0
  %v239 = vadd.f32 %v149, %v238
  %240 = vmatprep.mubr.f32.mxu0 %v36
  %241 = vmatmul.mubr.f32.gmra.mrb[0].mxu0 %v35
  %v242 = vpop.f32.mrb[0].mxu0
  %v243 = vadd.f32 %v145, %v242
  %v244 = vpop.f32.mrb[0].mxu0
  %v245 = vadd.f32 %v149, %v244
  %246 = vmatprep.mubr.f32.mxu0 %v38
  %247 = vmatmul.mubr.f32.gmra.mrb[0].mxu0 %v37
  %v248 = vpop.f32.mrb[0].mxu0
  %v249 = vadd.f32 %v145, %v248
  %v250 = vpop.f32.mrb[0].mxu0
  %v251 = vadd.f32 %v149, %v250
  %252 = vmatprep.mubr.f32.mxu0 %v40
  %253 = vmatmul.mubr.f32.gmra.mrb[0].mxu0 %v39
  %v254 = vpop.f32.mrb[0].mxu0
  %v255 = vadd.f32 %v145, %v254
  %v256 = vpop.f32.mrb[0].mxu0
  %v257 = vadd.f32 %v149, %v256
  %258 = vmatprep.mubr.f32.mxu0 %v42
  %259 = vmatmul.mubr.f32.gmra.mrb[0].mxu0 %v41
  %v260 = vpop.f32.mrb[0].mxu0
  %v261 = vadd.f32 %v145, %v260
  %v262 = vpop.f32.mrb[0].mxu0
  %v263 = vadd.f32 %v149, %v262
  %264 = vmatprep.mubr.f32.mxu0 %v44
  %265 = vmatmul.mubr.f32.gmra.mrb[0].mxu0 %v43
  %v266 = vpop.f32.mrb[0].mxu0
  %v267 = vadd.f32 %v145, %v266
  %v268 = vpop.f32.mrb[0].mxu0
  %v269 = vadd.f32 %v149, %v268
  %270 = vmatprep.mubr.f32.mxu0 %v46
  %271 = vmatmul.mubr.f32.gmra.mrb[0].mxu0 %v45
  %v272 = vpop.f32.mrb[0].mxu0
  %v273 = vadd.f32 %v145, %v272
  %v274 = vpop.f32.mrb[0].mxu0
  %v275 = vadd.f32 %v149, %v274
  %276 = vmatprep.mubr.f32.mxu0 %v48
  %277 = vmatmul.mubr.f32.gmra.mrb[0].mxu0 %v47
  %v278 = vpop.f32.mrb[0].mxu0
  %v279 = vadd.f32 %v145, %v278
  %v280 = vpop.f32.mrb[0].mxu0
  %v281 = vadd.f32 %v149, %v280
  %282 = vmatprep.mubr.f32.mxu0 %v50
  %283 = vmatmul.mubr.f32.gmra.mrb[0].mxu0 %v49
  %v284 = vpop.f32.mrb[0].mxu0
  %v285 = vadd.f32 %v145, %v284
  %v286 = vpop.f32.mrb[0].mxu0
  %v287 = vadd.f32 %v149, %v286
  %288 = vmatprep.mubr.f32.mxu0 %v52
  %289 = vmatmul.mubr.f32.gmra.mrb[0].mxu0 %v51
  %v290 = vpop.f32.mrb[0].mxu0
  %v291 = vadd.f32 %v145, %v290
  %v292 = vpop.f32.mrb[0].mxu0
  %v293 = vadd.f32 %v149, %v292
  %294 = vmatprep.mubr.f32.mxu0 %v54
  %295 = vmatmul.mubr.f32.gmra.mrb[0].mxu0 %v53
  %v296 = vpop.f32.mrb[0].mxu0
  %v297 = vadd.f32 %v145, %v296
  %v298 = vpop.f32.mrb[0].mxu0
  %v299 = vadd.f32 %v149, %v298
  %300 = vmatprep.mubr.f32.mxu0 %v56
  %301 = vmatmul.mubr.f32.gmra.mrb[0].mxu0 %v55
  %v302 = vpop.f32.mrb[0].mxu0
  %v303 = vadd.f32 %v145, %v302
  %v304 = vpop.f32.mrb[0].mxu0
  %v305 = vadd.f32 %v149, %v304
  %306 = vmatprep.mubr.f32.mxu0 %v58
  %307 = vmatmul.mubr.f32.gmra.mrb[0].mxu0 %v57
  %v308 = vpop.f32.mrb[0].mxu0
  %v309 = vadd.f32 %v145, %v308
  %v310 = vpop.f32.mrb[0].mxu0
  %v311 = vadd.f32 %v149, %v310
  %312 = vmatprep.mubr.f32.mxu0 %v60
  %313 = vmatmul.mubr.f32.gmra.mrb[0].mxu0 %v59
  %v314 = vpop.f32.mrb[0].mxu0
  %v315 = vadd.f32 %v145, %v314
  %v316 = vpop.f32.mrb[0].mxu0
  %v317 = vadd.f32 %v149, %v316
  %318 = vmatprep.mubr.f32.mxu0 %v62
  %319 = vmatmul.mubr.f32.gmra.mrb[0].mxu0 %v61
  %v320 = vpop.f32.mrb[0].mxu0
  %v321 = vadd.f32 %v145, %v320
  %v322 = vpop.f32.mrb[0].mxu0
  %v323 = vadd.f32 %v149, %v322
  %324 = vmatprep.mubr.f32.mxu0 %v64
  %325 = vmatmul.mubr.f32.gmra.mrb[0].mxu0 %v63
  %v326 = vpop.f32.mrb[0].mxu0
  %v327 = vadd.f32 %v145, %v326
  %v328 = vpop.f32.mrb[0].mxu0
  %v329 = vadd.f32 %v149, %v328
  %330 = vmatprep.mubr.f32.mxu0 %v66
  %331 = vmatmul.mubr.f32.gmra.mrb[0].mxu0 %v65
  %v332 = vpop.f32.mrb[0].mxu0
  %v333 = vadd.f32 %v145, %v332
  %v334 = vpop.f32.mrb[0].mxu0
  %v335 = vadd.f32 %v149, %v334
  %336 = vmatprep.mubr.f32.mxu0 %v68
  %337 = vmatmul.mubr.f32.gmra.mrb[0].mxu0 %v67
  %v338 = vpop.f32.mrb[0].mxu0
  %v339 = vadd.f32 %v145, %v338
  %v340 = vpop.f32.mrb[0].mxu0
  %v341 = vadd.f32 %v149, %v340
  %342 = vmatprep.mubr.f32.mxu0 %v70
  %343 = vmatmul.mubr.f32.gmra.mrb[0].mxu0 %v69
  %v344 = vpop.f32.mrb[0].mxu0
  %v345 = vadd.f32 %v145, %v344
  %v346 = vpop.f32.mrb[0].mxu0
  %v347 = vadd.f32 %v149, %v346
  %348 = vmatprep.mubr.f32.mxu0 %v72
  %349 = vmatmul.mubr.f32.gmra.mrb[0].mxu0 %v71
  %v350 = vpop.f32.mrb[0].mxu0
  %v351 = vadd.f32 %v145, %v350
  %v352 = vpop.f32.mrb[0].mxu0
  %v353 = vadd.f32 %v149, %v352
  %354 = vmatprep.mubr.f32.mxu0 %v74
  %355 = vmatmul.mubr.f32.gmra.mrb[0].mxu0 %v73
  %v356 = vpop.f32.mrb[0].mxu0
  %v357 = vadd.f32 %v145, %v356
  %v358 = vpop.f32.mrb[0].mxu0
  %v359 = vadd.f32 %v149, %v358
  %360 = vmatprep.mubr.f32.mxu0 %v76
  %361 = vmatmul.mubr.f32.gmra.mrb[0].mxu0 %v75
  %v362 = vpop.f32.mrb[0].mxu0
  %v363 = vadd.f32 %v145, %v362
  %v364 = vpop.f32.mrb[0].mxu0
  %v365 = vadd.f32 %v149, %v364
  %366 = vdwg.mxu0
  %v367 = vmax.f32 %v219, 0.0
  %v368 = vmax.f32 %v221, 0.0
  %v369 = vmax.f32 %v225, 0.0
  %v370 = vmax.f32 %v227, 0.0
  %v371 = vmax.f32 %v231, 0.0
  %v372 = vmax.f32 %v233, 0.0
  %v373 = vmax.f32 %v237, 0.0
  %v374 = vmax.f32 %v239, 0.0
  %v375 = vmax.f32 %v243, 0.0
  %v376 = vmax.f32 %v245, 0.0
  %v377 = vmax.f32 %v249, 0.0
  %v378 = vmax.f32 %v251, 0.0
  %v379 = vmax.f32 %v255, 0.0
  %v380 = vmax.f32 %v257, 0.0
  %v381 = vmax.f32 %v261, 0.0
  %v382 = vmax.f32 %v263, 0.0
  %v383 = vmax.f32 %v267, 0.0
  %v384 = vmax.f32 %v269, 0.0
  %v385 = vmax.f32 %v273, 0.0
  %v386 = vmax.f32 %v275, 0.0
  %v387 = vmax.f32 %v279, 0.0
  %v388 = vmax.f32 %v281, 0.0
  %v389 = vmax.f32 %v285, 0.0
  %v390 = vmax.f32 %v287, 0.0
  %v391 = vmax.f32 %v291, 0.0
  %v392 = vmax.f32 %v293, 0.0
  %v393 = vmax.f32 %v297, 0.0
  %v394 = vmax.f32 %v299, 0.0
  %v395 = vmax.f32 %v303, 0.0
  %v396 = vmax.f32 %v305, 0.0
  %v397 = vmax.f32 %v309, 0.0
  %v398 = vmax.f32 %v311, 0.0
  %v399 = vmax.f32 %v315, 0.0
  %v400 = vmax.f32 %v317, 0.0
  %v401 = vmax.f32 %v321, 0.0
  %v402 = vmax.f32 %v323, 0.0
  %v403 = vmax.f32 %v327, 0.0
  %v404 = vmax.f32 %v329, 0.0
  %v405 = vmax.f32 %v333, 0.0
  %v406 = vmax.f32 %v335, 0.0
  %v407 = vmax.f32 %v339, 0.0
  %v408 = vmax.f32 %v341, 0.0
  %v409 = vmax.f32 %v345, 0.0
  %v410 = vmax.f32 %v347, 0.0
  %v411 = vmax.f32 %v351, 0.0
  %v412 = vmax.f32 %v353, 0.0
  %v413 = vmax.f32 %v357, 0.0
  %v414 = vmax.f32 %v359, 0.0
  %v415 = vmax.f32 %v363, 0.0
  %v416 = vmax.f32 %v365, 0.0
  %v417 = vld [vmem:[%s2] sm:$0xff]
  %v418 = vld [vmem:[%s2 + $0x8] sm:$0xff]
  %v419 = vld [vmem:[%s2 + $0x10] sm:$0xff]
  %v420 = vld [vmem:[%s2 + $0x18] sm:$0xff]
  %v421 = vld [vmem:[%s2 + $0x20] sm:$0xff]
  %v422 = vld [vmem:[%s2 + $0x28] sm:$0xff]
  %v423 = vld [vmem:[%s2 + $0x30] sm:$0xff]
  %v424 = vld [vmem:[%s2 + $0x38] sm:$0xff]
  %v425 = vld [vmem:[%s2 + $0x40] sm:$0xff]
  %v426 = vld [vmem:[%s2 + $0x48] sm:$0xff]
  %v427 = vld [vmem:[%s2 + $0x50] sm:$0xff]
  %v428 = vld [vmem:[%s2 + $0x58] sm:$0xff]
  %v429 = vld [vmem:[%s2 + $0x60] sm:$0xff]
  %v430 = vld [vmem:[%s2 + $0x68] sm:$0xff]
  %v431 = vld [vmem:[%s2 + $0x70] sm:$0xff]
  %v432 = vld [vmem:[%s2 + $0x78] sm:$0xff]
  %v433 = vld [vmem:[%s2 + $0x80] sm:$0xff]
  %v434 = vld [vmem:[%s2 + $0x88] sm:$0xff]
  %v435 = vld [vmem:[%s2 + $0x90] sm:$0xff]
  %v436 = vld [vmem:[%s2 + $0x98] sm:$0xff]
  %v437 = vld [vmem:[%s2 + $0xa0] sm:$0xff]
  %v438 = vld [vmem:[%s2 + $0xa8] sm:$0xff]
  %v439 = vld [vmem:[%s2 + $0xb0] sm:$0xff]
  %v440 = vld [vmem:[%s2 + $0xb8] sm:$0xff]
  %v441 = vld [vmem:[%s2 + $0xc0] sm:$0xff]
  %v442 = vld [vmem:[%s2 + $0xc8] sm:$0xff]
  %v443 = vld [vmem:[%s2 + $0xd0] sm:$0xff]
  %v444 = vld [vmem:[%s2 + $0xd8] sm:$0xff]
  %v445 = vld [vmem:[%s2 + $0xe0] sm:$0xff]
  %v446 = vld [vmem:[%s2 + $0xe8] sm:$0xff]
  %v447 = vld [vmem:[%s2 + $0xf0] sm:$0xff]
  %v448 = vld [vmem:[%s2 + $0xf8] sm:$0xff]
  %449 = vmatprep.subr.mxu0 0.0
  %450 = vmatpush1.msra.mxu0 %v417
  %451 = vmatprep.subr.mxu0 0.0
  %452 = vmatpush1.msra.mxu0 %v418
  %453 = vmatprep.subr.mxu0 0.0
  %454 = vmatpush1.msra.mxu0 %v419
  %455 = vmatprep.subr.mxu0 0.0
  %456 = vmatpush1.msra.mxu0 %v420
  %457 = vmatprep.subr.mxu0 0.0
  %458 = vmatpush1.msra.mxu0 %v421
  %459 = vmatprep.subr.mxu0 0.0
  %460 = vmatpush1.msra.mxu0 %v422
  %461 = vmatprep.subr.mxu0 0.0
  %462 = vmatpush1.msra.mxu0 %v423
  %463 = vmatprep.subr.mxu0 0.0
  %464 = vmatpush1.msra.mxu0 %v424
  %465 = vmatprep.subr.mxu0 0.0
  %466 = vmatpush1.msra.mxu0 %v425
  %467 = vmatprep.subr.mxu0 0.0
  %468 = vmatpush1.msra.mxu0 %v426
  %469 = vmatprep.subr.mxu0 0.0
  %470 = vmatpush1.msra.mxu0 %v427
  %471 = vmatprep.subr.mxu0 0.0
  %472 = vmatpush1.msra.mxu0 %v428
  %473 = vmatprep.subr.mxu0 0.0
  %474 = vmatpush1.msra.mxu0 %v429
  %475 = vmatprep.subr.mxu0 0.0
  %476 = vmatpush1.msra.mxu0 %v430
  %477 = vmatprep.subr.mxu0 0.0
  %478 = vmatpush1.msra.mxu0 %v431
  %479 = vmatprep.subr.mxu0 0.0
  %480 = vmatpush1.msra.mxu0 %v432
  %481 = vmatprep.subr.mxu0 0.0
  %482 = vmatpush1.msra.mxu0 %v433
  %483 = vmatprep.subr.mxu0 0.0
  %484 = vmatpush1.msra.mxu0 %v434
  %485 = vmatprep.subr.mxu0 0.0
  %486 = vmatpush1.msra.mxu0 %v435
  %487 = vmatprep.subr.mxu0 0.0
  %488 = vmatpush1.msra.mxu0 %v436
  %489 = vmatprep.subr.mxu0 0.0
  %490 = vmatpush1.msra.mxu0 %v437
  %491 = vmatprep.subr.mxu0 0.0
  %492 = vmatpush1.msra.mxu0 %v438
  %493 = vmatprep.subr.mxu0 0.0
  %494 = vmatpush1.msra.mxu0 %v439
  %495 = vmatprep.subr.mxu0 0.0
  %496 = vmatpush1.msra.mxu0 %v440
  %497 = vmatprep.subr.mxu0 0.0
  %498 = vmatpush1.msra.mxu0 %v441
  %499 = vmatprep.subr.mxu0 0.0
  %500 = vmatpush1.msra.mxu0 %v442
  %501 = vmatprep.subr.mxu0 0.0
  %502 = vmatpush1.msra.mxu0 %v443
  %503 = vmatprep.subr.mxu0 0.0
  %504 = vmatpush1.msra.mxu0 %v444
  %505 = vmatprep.subr.mxu0 0.0
  %506 = vmatpush1.msra.mxu0 %v445
  %507 = vmatprep.subr.mxu0 0.0
  %508 = vmatpush1.msra.mxu0 %v446
  %509 = vmatprep.subr.mxu0 0.0
  %510 = vmatpush1.msra.mxu0 %v447
  %511 = vmatprep.subr.mxu0 0.0
  %512 = vmatpush1.msra.mxu0 %v448
  %513 = vmatprep.mubr.f32.mxu0 %v368
  %514 = vmatmul.mubr.f32.gmra.mrb[0].mxu0 %v367
  %v515 = vpop.f32.mrb[0].mxu0
  %v516 = vadd.f32 %v24, %v515
  %v517 = vpop.f32.mrb[0].mxu0
  %518 = vmatprep.mubr.f32.mxu0 %v370
  %519 = vmatmul.mubr.f32.gmra.mrb[0].mxu0 %v369
  %v520 = vpop.f32.mrb[0].mxu0
  %v521 = vadd.f32 %v24, %v520
  %v522 = vpop.f32.mrb[0].mxu0
  %523 = vmatprep.mubr.f32.mxu0 %v372
  %524 = vmatmul.mubr.f32.gmra.mrb[0].mxu0 %v371
  %v525 = vpop.f32.mrb[0].mxu0
  %v526 = vadd.f32 %v24, %v525
  %v527 = vpop.f32.mrb[0].mxu0
  %528 = vmatprep.mubr.f32.mxu0 %v374
  %529 = vmatmul.mubr.f32.gmra.mrb[0].mxu0 %v373
  %v530 = vpop.f32.mrb[0].mxu0
  %v531 = vadd.f32 %v24, %v530
  %v532 = vpop.f32.mrb[0].mxu0
  %533 = vmatprep.mubr.f32.mxu0 %v376
  %534 = vmatmul.mubr.f32.gmra.mrb[0].mxu0 %v375
  %v535 = vpop.f32.mrb[0].mxu0
  %v536 = vadd.f32 %v24, %v535
  %v537 = vpop.f32.mrb[0].mxu0
  %538 = vmatprep.mubr.f32.mxu0 %v378
  %539 = vmatmul.mubr.f32.gmra.mrb[0].mxu0 %v377
  %v540 = vpop.f32.mrb[0].mxu0
  %v541 = vadd.f32 %v24, %v540
  %v542 = vpop.f32.mrb[0].mxu0
  %543 = vmatprep.mubr.f32.mxu0 %v380
  %544 = vmatmul.mubr.f32.gmra.mrb[0].mxu0 %v379
  %v545 = vpop.f32.mrb[0].mxu0
  %v546 = vadd.f32 %v24, %v545
  %v547 = vpop.f32.mrb[0].mxu0
  %548 = vmatprep.mubr.f32.mxu0 %v382
  %549 = vmatmul.mubr.f32.gmra.mrb[0].mxu0 %v381
  %v550 = vpop.f32.mrb[0].mxu0
  %v551 = vadd.f32 %v24, %v550
  %v552 = vpop.f32.mrb[0].mxu0
  %553 = vmatprep.mubr.f32.mxu0 %v384
  %554 = vmatmul.mubr.f32.gmra.mrb[0].mxu0 %v383
  %v555 = vpop.f32.mrb[0].mxu0
  %v556 = vadd.f32 %v24, %v555
  %v557 = vpop.f32.mrb[0].mxu0
  %558 = vmatprep.mubr.f32.mxu0 %v386
  %559 = vmatmul.mubr.f32.gmra.mrb[0].mxu0 %v385
  %v560 = vpop.f32.mrb[0].mxu0
  %v561 = vadd.f32 %v24, %v560
  %v562 = vpop.f32.mrb[0].mxu0
  %563 = vmatprep.mubr.f32.mxu0 %v388
  %564 = vmatmul.mubr.f32.gmra.mrb[0].mxu0 %v387
  %v565 = vpop.f32.mrb[0].mxu0
  %v566 = vadd.f32 %v24, %v565
  %v567 = vpop.f32.mrb[0].mxu0
  %568 = vmatprep.mubr.f32.mxu0 %v390
  %569 = vmatmul.mubr.f32.gmra.mrb[0].mxu0 %v389
  %v570 = vpop.f32.mrb[0].mxu0
  %v571 = vadd.f32 %v24, %v570
  %v572 = vpop.f32.mrb[0].mxu0
  %573 = vmatprep.mubr.f32.mxu0 %v392
  %574 = vmatmul.mubr.f32.gmra.mrb[0].mxu0 %v391
  %v575 = vpop.f32.mrb[0].mxu0
  %v576 = vadd.f32 %v24, %v575
  %v577 = vpop.f32.mrb[0].mxu0
  %578 = vmatprep.mubr.f32.mxu0 %v394
  %579 = vmatmul.mubr.f32.gmra.mrb[0].mxu0 %v393
  %v580 = vpop.f32.mrb[0].mxu0
  %v581 = vadd.f32 %v24, %v580
  %v582 = vpop.f32.mrb[0].mxu0
  %583 = vmatprep.mubr.f32.mxu0 %v396
  %584 = vmatmul.mubr.f32.gmra.mrb[0].mxu0 %v395
  %v585 = vpop.f32.mrb[0].mxu0
  %v586 = vadd.f32 %v24, %v585
  %v587 = vpop.f32.mrb[0].mxu0
  %588 = vmatprep.mubr.f32.mxu0 %v398
  %589 = vmatmul.mubr.f32.gmra.mrb[0].mxu0 %v397
  %v590 = vpop.f32.mrb[0].mxu0
  %v591 = vadd.f32 %v24, %v590
  %v592 = vpop.f32.mrb[0].mxu0
  %593 = vmatprep.mubr.f32.mxu0 %v400
  %594 = vmatmul.mubr.f32.gmra.mrb[0].mxu0 %v399
  %v595 = vpop.f32.mrb[0].mxu0
  %v596 = vadd.f32 %v24, %v595
  %v597 = vpop.f32.mrb[0].mxu0
  %598 = vmatprep.mubr.f32.mxu0 %v402
  %599 = vmatmul.mubr.f32.gmra.mrb[0].mxu0 %v401
  %v600 = vpop.f32.mrb[0].mxu0
  %v601 = vadd.f32 %v24, %v600
  %v602 = vpop.f32.mrb[0].mxu0
  %603 = vmatprep.mubr.f32.mxu0 %v404
  %604 = vmatmul.mubr.f32.gmra.mrb[0].mxu0 %v403
  %v605 = vpop.f32.mrb[0].mxu0
  %v606 = vadd.f32 %v24, %v605
  %v607 = vpop.f32.mrb[0].mxu0
  %608 = vmatprep.mubr.f32.mxu0 %v406
  %609 = vmatmul.mubr.f32.gmra.mrb[0].mxu0 %v405
  %v610 = vpop.f32.mrb[0].mxu0
  %v611 = vadd.f32 %v24, %v610
  %v612 = vpop.f32.mrb[0].mxu0
  %613 = vmatprep.mubr.f32.mxu0 %v408
  %614 = vmatmul.mubr.f32.gmra.mrb[0].mxu0 %v407
  %v615 = vpop.f32.mrb[0].mxu0
  %v616 = vadd.f32 %v24, %v615
  %v617 = vpop.f32.mrb[0].mxu0
  %618 = vmatprep.mubr.f32.mxu0 %v410
  %619 = vmatmul.mubr.f32.gmra.mrb[0].mxu0 %v409
  %v620 = vpop.f32.mrb[0].mxu0
  %v621 = vadd.f32 %v24, %v620
  %v622 = vpop.f32.mrb[0].mxu0
  %623 = vmatprep.mubr.f32.mxu0 %v412
  %624 = vmatmul.mubr.f32.gmra.mrb[0].mxu0 %v411
  %v625 = vpop.f32.mrb[0].mxu0
  %v626 = vadd.f32 %v24, %v625
  %v627 = vpop.f32.mrb[0].mxu0
  %628 = vmatprep.mubr.f32.mxu0 %v414
  %629 = vmatmul.mubr.f32.gmra.mrb[0].mxu0 %v413
  %v630 = vpop.f32.mrb[0].mxu0
  %v631 = vadd.f32 %v24, %v630
  %v632 = vpop.f32.mrb[0].mxu0
  %633 = vmatprep.mubr.f32.mxu0 %v416
  %634 = vmatmul.mubr.f32.gmra.mrb[0].mxu0 %v415
  %v635 = vpop.f32.mrb[0].mxu0
  %v636 = vadd.f32 %v24, %v635
  %v637 = vpop.f32.mrb[0].mxu0
  %638 = vdwg.mxu0
  %v639 = vmax.f32 %v516, 0.0
  %v640 = vmax.f32 %v521, 0.0
  %v641 = vmax.f32 %v526, 0.0
  %v642 = vmax.f32 %v531, 0.0
  %v643 = vmax.f32 %v536, 0.0
  %v644 = vmax.f32 %v541, 0.0
  %v645 = vmax.f32 %v546, 0.0
  %v646 = vmax.f32 %v551, 0.0
  %v647 = vmax.f32 %v556, 0.0
  %v648 = vmax.f32 %v561, 0.0
  %v649 = vmax.f32 %v566, 0.0
  %v650 = vmax.f32 %v571, 0.0
  %v651 = vmax.f32 %v576, 0.0
  %v652 = vmax.f32 %v581, 0.0
  %v653 = vmax.f32 %v586, 0.0
  %v654 = vmax.f32 %v591, 0.0
  %v655 = vmax.f32 %v596, 0.0
  %v656 = vmax.f32 %v601, 0.0
  %v657 = vmax.f32 %v606, 0.0
  %v658 = vmax.f32 %v611, 0.0
  %v659 = vmax.f32 %v616, 0.0
  %v660 = vmax.f32 %v621, 0.0
  %v661 = vmax.f32 %v626, 0.0
  %v662 = vmax.f32 %v631, 0.0
  %v663 = vmax.f32 %v636, 0.0
  %v664 = vld [vmem:[%s3] sm:$0xff]
  %v665 = vld [vmem:[%s3 + $0x8] sm:$0xff]
  %v666 = vld [vmem:[%s3 + $0x10] sm:$0xff]
  %v667 = vld [vmem:[%s3 + $0x18] sm:$0xff]
  %v668 = vld [vmem:[%s3 + $0x20] sm:$0xff]
  %v669 = vld [vmem:[%s3 + $0x28] sm:$0xff]
  %v670 = vld [vmem:[%s3 + $0x30] sm:$0xff]
  %v671 = vld [vmem:[%s3 + $0x38] sm:$0xff]
  %v672 = vld [vmem:[%s3 + $0x40] sm:$0xff]
  %v673 = vld [vmem:[%s3 + $0x48] sm:$0xff]
  %v674 = vld [vmem:[%s3 + $0x50] sm:$0xff]
  %v675 = vld [vmem:[%s3 + $0x58] sm:$0xff]
  %v676 = vld [vmem:[%s3 + $0x60] sm:$0xff]
  %v677 = vld [vmem:[%s3 + $0x68] sm:$0xff]
  %v678 = vld [vmem:[%s3 + $0x70] sm:$0xff]
  %v679 = vld [vmem:[%s3 + $0x78] sm:$0xff]
  %v680 = vld [vmem:[%s3 + $0x80] sm:$0xff]
  %v681 = vld [vmem:[%s3 + $0x88] sm:$0xff]
  %v682 = vld [vmem:[%s3 + $0x90] sm:$0xff]
  %v683 = vld [vmem:[%s3 + $0x98] sm:$0xff]
  %v684 = vld [vmem:[%s3 + $0xa0] sm:$0xff]
  %v685 = vld [vmem:[%s3 + $0xa8] sm:$0xff]
  %v686 = vld [vmem:[%s3 + $0xb0] sm:$0xff]
  %v687 = vld [vmem:[%s3 + $0xb8] sm:$0xff]
  %v688 = vld [vmem:[%s3 + $0xc0] sm:$0xff]
  %v689 = vld [vmem:[%s3 + $0xc8] sm:$0xff]
  %v690 = vld [vmem:[%s3 + $0xd0] sm:$0xff]
  %v691 = vld [vmem:[%s3 + $0xd8] sm:$0xff]
  %v692 = vld [vmem:[%s3 + $0xe0] sm:$0xff]
  %v693 = vld [vmem:[%s3 + $0xe8] sm:$0xff]
  %v694 = vld [vmem:[%s3 + $0xf0] sm:$0xff]
  %v695 = vld [vmem:[%s3 + $0xf8] sm:$0xff]
  %v696 = vld [vmem:[%s3 + $0x100] sm:$0xff]
  %v697 = vld [vmem:[%s3 + $0x108] sm:$0xff]
  %v698 = vld [vmem:[%s3 + $0x110] sm:$0xff]
  %v699 = vld [vmem:[%s3 + $0x118] sm:$0xff]
  %v700 = vld [vmem:[%s3 + $0x120] sm:$0xff]
  %v701 = vld [vmem:[%s3 + $0x128] sm:$0xff]
  %v702 = vld [vmem:[%s3 + $0x130] sm:$0xff]
  %v703 = vld [vmem:[%s3 + $0x138] sm:$0xff]
  %v704 = vld [vmem:[%s3 + $0x140] sm:$0xff]
  %v705 = vld [vmem:[%s3 + $0x148] sm:$0xff]
  %v706 = vld [vmem:[%s3 + $0x150] sm:$0xff]
  %v707 = vld [vmem:[%s3 + $0x158] sm:$0xff]
  %v708 = vld [vmem:[%s3 + $0x160] sm:$0xff]
  %v709 = vld [vmem:[%s3 + $0x168] sm:$0xff]
  %v710 = vld [vmem:[%s3 + $0x170] sm:$0xff]
  %v711 = vld [vmem:[%s3 + $0x178] sm:$0xff]
  %v712 = vld [vmem:[%s3 + $0x180] sm:$0xff]
  %v713 = vld [vmem:[%s3 + $0x188] sm:$0xff]
  %v714 = vld [vmem:[%s3 + $0x190] sm:$0xff]
  %v715 = vld [vmem:[%s3 + $0x198] sm:$0xff]
  %v716 = vld [vmem:[%s3 + $0x1a0] sm:$0xff]
  %v717 = vld [vmem:[%s3 + $0x1a8] sm:$0xff]
  %v718 = vld [vmem:[%s3 + $0x1b0] sm:$0xff]
  %v719 = vld [vmem:[%s3 + $0x1b8] sm:$0xff]
  %v720 = vld [vmem:[%s3 + $0x1c0] sm:$0xff]
  %v721 = vld [vmem:[%s3 + $0x1c8] sm:$0xff]
  %v722 = vld [vmem:[%s3 + $0x1d0] sm:$0xff]
  %v723 = vld [vmem:[%s3 + $0x1d8] sm:$0xff]
  %v724 = vld [vmem:[%s3 + $0x1e0] sm:$0xff]
  %v725 = vld [vmem:[%s3 + $0x1e8] sm:$0xff]
  %v726 = vld [vmem:[%s3 + $0x1f0] sm:$0xff]
  %v727 = vld [vmem:[%s3 + $0x1f8] sm:$0xff]
  %v728 = vld [vmem:[%s3 + $0x200] sm:$0xff]
  %v729 = vld [vmem:[%s3 + $0x208] sm:$0xff]
  %v730 = vld [vmem:[%s3 + $0x210] sm:$0xff]
  %v731 = vld [vmem:[%s3 + $0x218] sm:$0xff]
  %v732 = vld [vmem:[%s3 + $0x220] sm:$0xff]
  %v733 = vld [vmem:[%s3 + $0x228] sm:$0xff]
  %v734 = vld [vmem:[%s3 + $0x230] sm:$0xff]
  %v735 = vld [vmem:[%s3 + $0x238] sm:$0xff]
  %v736 = vld [vmem:[%s3 + $0x240] sm:$0xff]
  %v737 = vld [vmem:[%s3 + $0x248] sm:$0xff]
  %v738 = vld [vmem:[%s3 + $0x250] sm:$0xff]
  %v739 = vld [vmem:[%s3 + $0x258] sm:$0xff]
  %v740 = vld [vmem:[%s3 + $0x260] sm:$0xff]
  %v741 = vld [vmem:[%s3 + $0x268] sm:$0xff]
  %v742 = vld [vmem:[%s3 + $0x270] sm:$0xff]
  %v743 = vld [vmem:[%s3 + $0x278] sm:$0xff]
  %v744 = vld [vmem:[%s3 + $0x280] sm:$0xff]
  %v745 = vld [vmem:[%s3 + $0x288] sm:$0xff]
  %v746 = vld [vmem:[%s3 + $0x290] sm:$0xff]
  %v747 = vld [vmem:[%s3 + $0x298] sm:$0xff]
  %v748 = vld [vmem:[%s3 + $0x2a0] sm:$0xff]
  %v749 = vld [vmem:[%s3 + $0x2a8] sm:$0xff]
  %v750 = vld [vmem:[%s3 + $0x2b0] sm:$0xff]
  %v751 = vld [vmem:[%s3 + $0x2b8] sm:$0xff]
  %v752 = vld [vmem:[%s3 + $0x2c0] sm:$0xff]
  %v753 = vld [vmem:[%s3 + $0x2c8] sm:$0xff]
  %v754 = vld [vmem:[%s3 + $0x2d0] sm:$0xff]
  %v755 = vld [vmem:[%s3 + $0x2d8] sm:$0xff]
  %v756 = vld [vmem:[%s3 + $0x2e0] sm:$0xff]
  %v757 = vld [vmem:[%s3 + $0x2e8] sm:$0xff]
  %v758 = vld [vmem:[%s3 + $0x2f0] sm:$0xff]
  %v759 = vld [vmem:[%s3 + $0x2f8] sm:$0xff]
  %v760 = vld [vmem:[%s3 + $0x300] sm:$0xff]
  %v761 = vld [vmem:[%s3 + $0x308] sm:$0xff]
  %v762 = vld [vmem:[%s3 + $0x310] sm:$0xff]
  %v763 = vld [vmem:[%s3 + $0x318] sm:$0xff]
  %v764 = vld [vmem:[%s3 + $0x320] sm:$0xff]
  %v765 = vld [vmem:[%s3 + $0x328] sm:$0xff]
  %v766 = vld [vmem:[%s3 + $0x330] sm:$0xff]
  %v767 = vld [vmem:[%s3 + $0x338] sm:$0xff]
  %v768 = vld [vmem:[%s3 + $0x340] sm:$0xff]
  %v769 = vld [vmem:[%s3 + $0x348] sm:$0xff]
  %v770 = vld [vmem:[%s3 + $0x350] sm:$0xff]
  %v771 = vld [vmem:[%s3 + $0x358] sm:$0xff]
  %v772 = vld [vmem:[%s3 + $0x360] sm:$0xff]
  %v773 = vld [vmem:[%s3 + $0x368] sm:$0xff]
  %v774 = vld [vmem:[%s3 + $0x370] sm:$0xff]
  %v775 = vld [vmem:[%s3 + $0x378] sm:$0xff]
  %v776 = vld [vmem:[%s3 + $0x380] sm:$0xff]
  %v777 = vld [vmem:[%s3 + $0x388] sm:$0xff]
  %v778 = vld [vmem:[%s3 + $0x390] sm:$0xff]
  %v779 = vld [vmem:[%s3 + $0x398] sm:$0xff]
  %v780 = vld [vmem:[%s3 + $0x3a0] sm:$0xff]
  %v781 = vld [vmem:[%s3 + $0x3a8] sm:$0xff]
  %v782 = vld [vmem:[%s3 + $0x3b0] sm:$0xff]
  %v783 = vld [vmem:[%s3 + $0x3b8] sm:$0xff]
  %v784 = vld [vmem:[%s3 + $0x3c0] sm:$0xff]
  %v785 = vld [vmem:[%s3 + $0x3c8] sm:$0xff]
  %v786 = vld [vmem:[%s3 + $0x3d0] sm:$0xff]
  %v787 = vld [vmem:[%s3 + $0x3d8] sm:$0xff]
  %v788 = vld [vmem:[%s3 + $0x3e0] sm:$0xff]
  %v789 = vld [vmem:[%s3 + $0x3e8] sm:$0xff]
  %v790 = vld [vmem:[%s3 + $0x3f0] sm:$0xff]
  %v791 = vld [vmem:[%s3 + $0x3f8] sm:$0xff]
  %v792 = vld [vmem:[%s3 + $0x400] sm:$0xff]
  %v793 = vld [vmem:[%s3 + $0x408] sm:$0xff]
  %v794 = vld [vmem:[%s3 + $0x410] sm:$0xff]
  %v795 = vld [vmem:[%s3 + $0x418] sm:$0xff]
  %v796 = vld [vmem:[%s3 + $0x420] sm:$0xff]
  %v797 = vld [vmem:[%s3 + $0x428] sm:$0xff]
  %v798 = vld [vmem:[%s3 + $0x430] sm:$0xff]
  %v799 = vld [vmem:[%s3 + $0x438] sm:$0xff]
  %v800 = vld [vmem:[%s3 + $0x440] sm:$0xff]
  %v801 = vld [vmem:[%s3 + $0x448] sm:$0xff]
  %v802 = vld [vmem:[%s3 + $0x450] sm:$0xff]
  %v803 = vld [vmem:[%s3 + $0x458] sm:$0xff]
  %v804 = vld [vmem:[%s3 + $0x460] sm:$0xff]
  %v805 = vld [vmem:[%s3 + $0x468] sm:$0xff]
  %v806 = vld [vmem:[%s3 + $0x470] sm:$0xff]
  %v807 = vld [vmem:[%s3 + $0x478] sm:$0xff]
  %v808 = vld [vmem:[%s3 + $0x480] sm:$0xff]
  %v809 = vld [vmem:[%s3 + $0x488] sm:$0xff]
  %v810 = vld [vmem:[%s3 + $0x490] sm:$0xff]
  %v811 = vld [vmem:[%s3 + $0x498] sm:$0xff]
  %v812 = vld [vmem:[%s3 + $0x4a0] sm:$0xff]
  %v813 = vld [vmem:[%s3 + $0x4a8] sm:$0xff]
  %v814 = vld [vmem:[%s3 + $0x4b0] sm:$0xff]
  %v815 = vld [vmem:[%s3 + $0x4b8] sm:$0xff]
  %v816 = vld [vmem:[%s3 + $0x4c0] sm:$0xff]
  %v817 = vld [vmem:[%s3 + $0x4c8] sm:$0xff]
  %v818 = vld [vmem:[%s3 + $0x4d0] sm:$0xff]
  %v819 = vld [vmem:[%s3 + $0x4d8] sm:$0xff]
  %v820 = vld [vmem:[%s3 + $0x4e0] sm:$0xff]
  %v821 = vld [vmem:[%s3 + $0x4e8] sm:$0xff]
  %v822 = vld [vmem:[%s3 + $0x4f0] sm:$0xff]
  %v823 = vld [vmem:[%s3 + $0x4f8] sm:$0xff]
  %v824 = vld [vmem:[%s3 + $0x500] sm:$0xff]
  %v825 = vld [vmem:[%s3 + $0x508] sm:$0xff]
  %v826 = vld [vmem:[%s3 + $0x510] sm:$0xff]
  %v827 = vld [vmem:[%s3 + $0x518] sm:$0xff]
  %v828 = vld [vmem:[%s3 + $0x520] sm:$0xff]
  %v829 = vld [vmem:[%s3 + $0x528] sm:$0xff]
  %v830 = vld [vmem:[%s3 + $0x530] sm:$0xff]
  %v831 = vld [vmem:[%s3 + $0x538] sm:$0xff]
  %v832 = vld [vmem:[%s3 + $0x540] sm:$0xff]
  %v833 = vld [vmem:[%s3 + $0x548] sm:$0xff]
  %v834 = vld [vmem:[%s3 + $0x550] sm:$0xff]
  %v835 = vld [vmem:[%s3 + $0x558] sm:$0xff]
  %v836 = vld [vmem:[%s3 + $0x560] sm:$0xff]
  %v837 = vld [vmem:[%s3 + $0x568] sm:$0xff]
  %v838 = vld [vmem:[%s3 + $0x570] sm:$0xff]
  %v839 = vld [vmem:[%s3 + $0x578] sm:$0xff]
  %v840 = vld [vmem:[%s3 + $0x580] sm:$0xff]
  %v841 = vld [vmem:[%s3 + $0x588] sm:$0xff]
  %v842 = vld [vmem:[%s3 + $0x590] sm:$0xff]
  %v843 = vld [vmem:[%s3 + $0x598] sm:$0xff]
  %v844 = vld [vmem:[%s3 + $0x5a0] sm:$0xff]
  %v845 = vld [vmem:[%s3 + $0x5a8] sm:$0xff]
  %v846 = vld [vmem:[%s3 + $0x5b0] sm:$0xff]
  %v847 = vld [vmem:[%s3 + $0x5b8] sm:$0xff]
  %v848 = vld [vmem:[%s3 + $0x5c0] sm:$0xff]
  %v849 = vld [vmem:[%s3 + $0x5c8] sm:$0xff]
  %v850 = vld [vmem:[%s3 + $0x5d0] sm:$0xff]
  %v851 = vld [vmem:[%s3 + $0x5d8] sm:$0xff]
  %v852 = vld [vmem:[%s3 + $0x5e0] sm:$0xff]
  %v853 = vld [vmem:[%s3 + $0x5e8] sm:$0xff]
  %v854 = vld [vmem:[%s3 + $0x5f0] sm:$0xff]
  %v855 = vld [vmem:[%s3 + $0x5f8] sm:$0xff]
  %v856 = vld [vmem:[%s3 + $0x600] sm:$0xff]
  %v857 = vld [vmem:[%s3 + $0x608] sm:$0xff]
  %v858 = vld [vmem:[%s3 + $0x610] sm:$0xff]
  %v859 = vld [vmem:[%s3 + $0x618] sm:$0xff]
  %v860 = vld [vmem:[%s3 + $0x620] sm:$0xff]
  %v861 = vld [vmem:[%s3 + $0x628] sm:$0xff]
  %v862 = vld [vmem:[%s3 + $0x630] sm:$0xff]
  %v863 = vld [vmem:[%s3 + $0x638] sm:$0xff]
  %v864 = vld [vmem:[%s3 + $0x640] sm:$0xff]
  %v865 = vld [vmem:[%s3 + $0x648] sm:$0xff]
  %v866 = vld [vmem:[%s3 + $0x650] sm:$0xff]
  %v867 = vld [vmem:[%s3 + $0x658] sm:$0xff]
  %v868 = vld [vmem:[%s3 + $0x660] sm:$0xff]
  %v869 = vld [vmem:[%s3 + $0x668] sm:$0xff]
  %v870 = vld [vmem:[%s3 + $0x670] sm:$0xff]
  %v871 = vld [vmem:[%s3 + $0x678] sm:$0xff]
  %v872 = vld [vmem:[%s3 + $0x680] sm:$0xff]
  %v873 = vld [vmem:[%s3 + $0x688] sm:$0xff]
  %v874 = vld [vmem:[%s3 + $0x690] sm:$0xff]
  %v875 = vld [vmem:[%s3 + $0x698] sm:$0xff]
  %v876 = vld [vmem:[%s3 + $0x6a0] sm:$0xff]
  %v877 = vld [vmem:[%s3 + $0x6a8] sm:$0xff]
  %v878 = vld [vmem:[%s3 + $0x6b0] sm:$0xff]
  %v879 = vld [vmem:[%s3 + $0x6b8] sm:$0xff]
  %v880 = vld [vmem:[%s3 + $0x6c0] sm:$0xff]
  %v881 = vld [vmem:[%s3 + $0x6c8] sm:$0xff]
  %v882 = vld [vmem:[%s3 + $0x6d0] sm:$0xff]
  %v883 = vld [vmem:[%s3 + $0x6d8] sm:$0xff]
  %v884 = vld [vmem:[%s3 + $0x6e0] sm:$0xff]
  %v885 = vld [vmem:[%s3 + $0x6e8] sm:$0xff]
  %v886 = vld [vmem:[%s3 + $0x6f0] sm:$0xff]
  %v887 = vld [vmem:[%s3 + $0x6f8] sm:$0xff]
  %v888 = vld [vmem:[%s3 + $0x700] sm:$0xff]
  %v889 = vld [vmem:[%s3 + $0x708] sm:$0xff]
  %v890 = vld [vmem:[%s3 + $0x710] sm:$0xff]
  %v891 = vld [vmem:[%s3 + $0x718] sm:$0xff]
  %v892 = vld [vmem:[%s3 + $0x720] sm:$0xff]
  %v893 = vld [vmem:[%s3 + $0x728] sm:$0xff]
  %v894 = vld [vmem:[%s3 + $0x730] sm:$0xff]
  %v895 = vld [vmem:[%s3 + $0x738] sm:$0xff]
  %v896 = vld [vmem:[%s3 + $0x740] sm:$0xff]
  %v897 = vld [vmem:[%s3 + $0x748] sm:$0xff]
  %v898 = vld [vmem:[%s3 + $0x750] sm:$0xff]
  %v899 = vld [vmem:[%s3 + $0x758] sm:$0xff]
  %v900 = vld [vmem:[%s3 + $0x760] sm:$0xff]
  %v901 = vld [vmem:[%s3 + $0x768] sm:$0xff]
  %v902 = vld [vmem:[%s3 + $0x770] sm:$0xff]
  %v903 = vld [vmem:[%s3 + $0x778] sm:$0xff]
  %v904 = vld [vmem:[%s3 + $0x780] sm:$0xff]
  %v905 = vld [vmem:[%s3 + $0x788] sm:$0xff]
  %v906 = vld [vmem:[%s3 + $0x790] sm:$0xff]
  %v907 = vld [vmem:[%s3 + $0x798] sm:$0xff]
  %v908 = vld [vmem:[%s3 + $0x7a0] sm:$0xff]
  %v909 = vld [vmem:[%s3 + $0x7a8] sm:$0xff]
  %v910 = vld [vmem:[%s3 + $0x7b0] sm:$0xff]
  %v911 = vld [vmem:[%s3 + $0x7b8] sm:$0xff]
  %v912 = vld [vmem:[%s3 + $0x7c0] sm:$0xff]
  %v913 = vld [vmem:[%s3 + $0x7c8] sm:$0xff]
  %v914 = vld [vmem:[%s3 + $0x7d0] sm:$0xff]
  %v915 = vld [vmem:[%s3 + $0x7d8] sm:$0xff]
  %v916 = vld [vmem:[%s3 + $0x7e0] sm:$0xff]
  %v917 = vld [vmem:[%s3 + $0x7e8] sm:$0xff]
  %v918 = vld [vmem:[%s3 + $0x7f0] sm:$0xff]
  %v919 = vld [vmem:[%s3 + $0x7f8] sm:$0xff]
  %v920 = vld [vmem:[%s3 + $0x800] sm:$0xff]
  %v921 = vld [vmem:[%s3 + $0x808] sm:$0xff]
  %v922 = vld [vmem:[%s3 + $0x810] sm:$0xff]
  %v923 = vld [vmem:[%s3 + $0x818] sm:$0xff]
  %v924 = vld [vmem:[%s3 + $0x820] sm:$0xff]
  %v925 = vld [vmem:[%s3 + $0x828] sm:$0xff]
  %v926 = vld [vmem:[%s3 + $0x830] sm:$0xff]
  %v927 = vld [vmem:[%s3 + $0x838] sm:$0xff]
  %v928 = vld [vmem:[%s3 + $0x840] sm:$0xff]
  %v929 = vld [vmem:[%s3 + $0x848] sm:$0xff]
  %v930 = vld [vmem:[%s3 + $0x850] sm:$0xff]
  %v931 = vld [vmem:[%s3 + $0x858] sm:$0xff]
  %v932 = vld [vmem:[%s3 + $0x860] sm:$0xff]
  %v933 = vld [vmem:[%s3 + $0x868] sm:$0xff]
  %v934 = vld [vmem:[%s3 + $0x870] sm:$0xff]
  %v935 = vld [vmem:[%s3 + $0x878] sm:$0xff]
  %v936 = vld [vmem:[%s3 + $0x880] sm:$0xff]
  %v937 = vld [vmem:[%s3 + $0x888] sm:$0xff]
  %v938 = vld [vmem:[%s3 + $0x890] sm:$0xff]
  %v939 = vld [vmem:[%s3 + $0x898] sm:$0xff]
  %v940 = vld [vmem:[%s3 + $0x8a0] sm:$0xff]
  %v941 = vld [vmem:[%s3 + $0x8a8] sm:$0xff]
  %v942 = vld [vmem:[%s3 + $0x8b0] sm:$0xff]
  %v943 = vld [vmem:[%s3 + $0x8b8] sm:$0xff]
  %v944 = vld [vmem:[%s3 + $0x8c0] sm:$0xff]
  %v945 = vld [vmem:[%s3 + $0x8c8] sm:$0xff]
  %v946 = vld [vmem:[%s3 + $0x8d0] sm:$0xff]
  %v947 = vld [vmem:[%s3 + $0x8d8] sm:$0xff]
  %v948 = vld [vmem:[%s3 + $0x8e0] sm:$0xff]
  %v949 = vld [vmem:[%s3 + $0x8e8] sm:$0xff]
  %v950 = vld [vmem:[%s3 + $0x8f0] sm:$0xff]
  %v951 = vld [vmem:[%s3 + $0x8f8] sm:$0xff]
  %v952 = vld [vmem:[%s3 + $0x900] sm:$0xff]
  %v953 = vld [vmem:[%s3 + $0x908] sm:$0xff]
  %v954 = vld [vmem:[%s3 + $0x910] sm:$0xff]
  %v955 = vld [vmem:[%s3 + $0x918] sm:$0xff]
  %v956 = vld [vmem:[%s3 + $0x920] sm:$0xff]
  %v957 = vld [vmem:[%s3 + $0x928] sm:$0xff]
  %v958 = vld [vmem:[%s3 + $0x930] sm:$0xff]
  %v959 = vld [vmem:[%s3 + $0x938] sm:$0xff]
  %v960 = vld [vmem:[%s3 + $0x940] sm:$0xff]
  %v961 = vld [vmem:[%s3 + $0x948] sm:$0xff]
  %v962 = vld [vmem:[%s3 + $0x950] sm:$0xff]
  %v963 = vld [vmem:[%s3 + $0x958] sm:$0xff]
  %v964 = vld [vmem:[%s3 + $0x960] sm:$0xff]
  %v965 = vld [vmem:[%s3 + $0x968] sm:$0xff]
  %v966 = vld [vmem:[%s3 + $0x970] sm:$0xff]
  %v967 = vld [vmem:[%s3 + $0x978] sm:$0xff]
  %v968 = vld [vmem:[%s3 + $0x980] sm:$0xff]
  %v969 = vld [vmem:[%s3 + $0x988] sm:$0xff]
  %v970 = vld [vmem:[%s3 + $0x990] sm:$0xff]
  %v971 = vld [vmem:[%s3 + $0x998] sm:$0xff]
  %v972 = vld [vmem:[%s3 + $0x9a0] sm:$0xff]
  %v973 = vld [vmem:[%s3 + $0x9a8] sm:$0xff]
  %v974 = vld [vmem:[%s3 + $0x9b0] sm:$0xff]
  %v975 = vld [vmem:[%s3 + $0x9b8] sm:$0xff]
  %v976 = vld [vmem:[%s3 + $0x9c0] sm:$0xff]
  %v977 = vld [vmem:[%s3 + $0x9c8] sm:$0xff]
  %v978 = vld [vmem:[%s3 + $0x9d0] sm:$0xff]
  %v979 = vld [vmem:[%s3 + $0x9d8] sm:$0xff]
  %v980 = vld [vmem:[%s3 + $0x9e0] sm:$0xff]
  %v981 = vld [vmem:[%s3 + $0x9e8] sm:$0xff]
  %v982 = vld [vmem:[%s3 + $0x9f0] sm:$0xff]
  %v983 = vld [vmem:[%s3 + $0x9f8] sm:$0xff]
  %v984 = vld [vmem:[%s3 + $0xa00] sm:$0xff]
  %v985 = vld [vmem:[%s3 + $0xa08] sm:$0xff]
  %v986 = vld [vmem:[%s3 + $0xa10] sm:$0xff]
  %v987 = vld [vmem:[%s3 + $0xa18] sm:$0xff]
  %v988 = vld [vmem:[%s3 + $0xa20] sm:$0xff]
  %v989 = vld [vmem:[%s3 + $0xa28] sm:$0xff]
  %v990 = vld [vmem:[%s3 + $0xa30] sm:$0xff]
  %v991 = vld [vmem:[%s3 + $0xa38] sm:$0xff]
  %v992 = vld [vmem:[%s3 + $0xa40] sm:$0xff]
  %v993 = vld [vmem:[%s3 + $0xa48] sm:$0xff]
  %v994 = vld [vmem:[%s3 + $0xa50] sm:$0xff]
  %v995 = vld [vmem:[%s3 + $0xa58] sm:$0xff]
  %v996 = vld [vmem:[%s3 + $0xa60] sm:$0xff]
  %v997 = vld [vmem:[%s3 + $0xa68] sm:$0xff]
  %v998 = vld [vmem:[%s3 + $0xa70] sm:$0xff]
  %v999 = vld [vmem:[%s3 + $0xa78] sm:$0xff]
  %v1000 = vld [vmem:[%s3 + $0xa80] sm:$0xff]
  %v1001 = vld [vmem:[%s3 + $0xa88] sm:$0xff]
  %v1002 = vld [vmem:[%s3 + $0xa90] sm:$0xff]
  %v1003 = vld [vmem:[%s3 + $0xa98] sm:$0xff]
  %v1004 = vld [vmem:[%s3 + $0xaa0] sm:$0xff]
  %v1005 = vld [vmem:[%s3 + $0xaa8] sm:$0xff]
  %v1006 = vld [vmem:[%s3 + $0xab0] sm:$0xff]
  %v1007 = vld [vmem:[%s3 + $0xab8] sm:$0xff]
  %v1008 = vld [vmem:[%s3 + $0xac0] sm:$0xff]
  %v1009 = vld [vmem:[%s3 + $0xac8] sm:$0xff]
  %v1010 = vld [vmem:[%s3 + $0xad0] sm:$0xff]
  %v1011 = vld [vmem:[%s3 + $0xad8] sm:$0xff]
  %v1012 = vld [vmem:[%s3 + $0xae0] sm:$0xff]
  %v1013 = vld [vmem:[%s3 + $0xae8] sm:$0xff]
  %v1014 = vld [vmem:[%s3 + $0xaf0] sm:$0xff]
  %v1015 = vld [vmem:[%s3 + $0xaf8] sm:$0xff]
  %v1016 = vld [vmem:[%s3 + $0xb00] sm:$0xff]
  %v1017 = vld [vmem:[%s3 + $0xb08] sm:$0xff]
  %v1018 = vld [vmem:[%s3 + $0xb10] sm:$0xff]
  %v1019 = vld [vmem:[%s3 + $0xb18] sm:$0xff]
  %v1020 = vld [vmem:[%s3 + $0xb20] sm:$0xff]
  %v1021 = vld [vmem:[%s3 + $0xb28] sm:$0xff]
  %v1022 = vld [vmem:[%s3 + $0xb30] sm:$0xff]
  %v1023 = vld [vmem:[%s3 + $0xb38] sm:$0xff]
  %v1024 = vld [vmem:[%s3 + $0xb40] sm:$0xff]
  %v1025 = vld [vmem:[%s3 + $0xb48] sm:$0xff]
  %v1026 = vld [vmem:[%s3 + $0xb50] sm:$0xff]
  %v1027 = vld [vmem:[%s3 + $0xb58] sm:$0xff]
  %v1028 = vld [vmem:[%s3 + $0xb60] sm:$0xff]
  %v1029 = vld [vmem:[%s3 + $0xb68] sm:$0xff]
  %v1030 = vld [vmem:[%s3 + $0xb70] sm:$0xff]
  %v1031 = vld [vmem:[%s3 + $0xb78] sm:$0xff]
  %v1032 = vld [vmem:[%s3 + $0xb80] sm:$0xff]
  %v1033 = vld [vmem:[%s3 + $0xb88] sm:$0xff]
  %v1034 = vld [vmem:[%s3 + $0xb90] sm:$0xff]
  %v1035 = vld [vmem:[%s3 + $0xb98] sm:$0xff]
  %v1036 = vld [vmem:[%s3 + $0xba0] sm:$0xff]
  %v1037 = vld [vmem:[%s3 + $0xba8] sm:$0xff]
  %v1038 = vld [vmem:[%s3 + $0xbb0] sm:$0xff]
  %v1039 = vld [vmem:[%s3 + $0xbb8] sm:$0xff]
  %v1040 = vld [vmem:[%s3 + $0xbc0] sm:$0xff]
  %v1041 = vld [vmem:[%s3 + $0xbc8] sm:$0xff]
  %v1042 = vld [vmem:[%s3 + $0xbd0] sm:$0xff]
  %v1043 = vld [vmem:[%s3 + $0xbd8] sm:$0xff]
  %v1044 = vld [vmem:[%s3 + $0xbe0] sm:$0xff]
  %v1045 = vld [vmem:[%s3 + $0xbe8] sm:$0xff]
  %v1046 = vld [vmem:[%s3 + $0xbf0] sm:$0xff]
  %v1047 = vld [vmem:[%s3 + $0xbf8] sm:$0xff]
  %v1048 = vld [vmem:[%s3 + $0xc00] sm:$0xff]
  %v1049 = vld [vmem:[%s3 + $0xc08] sm:$0xff]
  %v1050 = vld [vmem:[%s3 + $0xc10] sm:$0xff]
  %v1051 = vld [vmem:[%s3 + $0xc18] sm:$0xff]
  %v1052 = vld [vmem:[%s3 + $0xc20] sm:$0xff]
  %v1053 = vld [vmem:[%s3 + $0xc28] sm:$0xff]
  %v1054 = vld [vmem:[%s3 + $0xc30] sm:$0xff]
  %v1055 = vld [vmem:[%s3 + $0xc38] sm:$0xff]
  %v1056 = vld [vmem:[%s3 + $0xc40] sm:$0xff]
  %v1057 = vld [vmem:[%s3 + $0xc48] sm:$0xff]
  %v1058 = vld [vmem:[%s3 + $0xc50] sm:$0xff]
  %v1059 = vld [vmem:[%s3 + $0xc58] sm:$0xff]
  %v1060 = vld [vmem:[%s3 + $0xc60] sm:$0xff]
  %v1061 = vld [vmem:[%s3 + $0xc68] sm:$0xff]
  %v1062 = vld [vmem:[%s3 + $0xc70] sm:$0xff]
  %v1063 = vld [vmem:[%s3 + $0xc78] sm:$0xff]
  %1064 = vmatprep.subr.mxu0 0.0
  %1065 = vmatpush1.msra.mxu0 %v664
  %1066 = vmatprep.subr.mxu0 0.0
  %1067 = vmatpush1.msra.mxu0 %v665
  %1068 = vmatprep.subr.mxu0 0.0
  %1069 = vmatpush1.msra.mxu0 %v666
  %1070 = vmatprep.subr.mxu0 0.0
  %1071 = vmatpush1.msra.mxu0 %v667
  %1072 = vmatprep.subr.mxu0 0.0
  %1073 = vmatpush1.msra.mxu0 %v668
  %1074 = vmatprep.subr.mxu0 0.0
  %1075 = vmatpush1.msra.mxu0 %v669
  %1076 = vmatprep.subr.mxu0 0.0
  %1077 = vmatpush1.msra.mxu0 %v670
  %1078 = vmatprep.subr.mxu0 0.0
  %1079 = vmatpush1.msra.mxu0 %v671
  %1080 = vmatprep.subr.mxu0 0.0
  %1081 = vmatpush1.msra.mxu0 %v672
  %1082 = vmatprep.subr.mxu0 0.0
  %1083 = vmatpush1.msra.mxu0 %v673
  %1084 = vmatprep.subr.mxu0 0.0
  %1085 = vmatpush1.msra.mxu0 %v674
  %1086 = vmatprep.subr.mxu0 0.0
  %1087 = vmatpush1.msra.mxu0 %v675
  %1088 = vmatprep.subr.mxu0 0.0
  %1089 = vmatpush1.msra.mxu0 %v676
  %1090 = vmatprep.subr.mxu0 0.0
  %1091 = vmatpush1.msra.mxu0 %v677
  %1092 = vmatprep.subr.mxu0 0.0
  %1093 = vmatpush1.msra.mxu0 %v678
  %1094 = vmatprep.subr.mxu0 0.0
  %1095 = vmatpush1.msra.mxu0 %v679
  %1096 = vmatprep.subr.mxu0 0.0
  %1097 = vmatpush1.msra.mxu0 %v680
  %1098 = vmatprep.subr.mxu0 0.0
  %1099 = vmatpush1.msra.mxu0 %v681
  %1100 = vmatprep.subr.mxu0 0.0
  %1101 = vmatpush1.msra.mxu0 %v682
  %1102 = vmatprep.subr.mxu0 0.0
  %1103 = vmatpush1.msra.mxu0 %v683
  %1104 = vmatprep.subr.mxu0 0.0
  %1105 = vmatpush1.msra.mxu0 %v684
  %1106 = vmatprep.subr.mxu0 0.0
  %1107 = vmatpush1.msra.mxu0 %v685
  %1108 = vmatprep.subr.mxu0 0.0
  %1109 = vmatpush1.msra.mxu0 %v686
  %1110 = vmatprep.subr.mxu0 0.0
  %1111 = vmatpush1.msra.mxu0 %v687
  %1112 = vmatprep.subr.mxu0 0.0
  %1113 = vmatpush1.msra.mxu0 %v688
  %1114 = vmatprep.subr.mxu0 0.0
  %1115 = vmatpush1.msra.mxu0 %v689
  %1116 = vmatprep.subr.mxu0 0.0
  %1117 = vmatpush1.msra.mxu0 %v690
  %1118 = vmatprep.subr.mxu0 0.0
  %1119 = vmatpush1.msra.mxu0 %v691
  %1120 = vmatprep.subr.mxu0 0.0
  %1121 = vmatpush1.msra.mxu0 %v692
  %1122 = vmatprep.subr.mxu0 0.0
  %1123 = vmatpush1.msra.mxu0 %v693
  %1124 = vmatprep.subr.mxu0 0.0
  %1125 = vmatpush1.msra.mxu0 %v694
  %1126 = vmatprep.subr.mxu0 0.0
  %1127 = vmatpush1.msra.mxu0 %v695
  %1128 = vmatprep.mubr.f32.mxu0 %v640
  %1129 = vmatmul.mubr.f32.gmra.mrb[0].mxu0 %v639
  %v1130 = vpop.f32.mrb[0].mxu0
  %v1131 = vadd.f32 %v25, %v1130
  %v1132 = vpop.f32.mrb[0].mxu0
  %1133 = vdwg.mxu0
  %1134 = vmatprep.subr.mxu0 0.0
  %1135 = vmatpush1.msra.mxu0 %v696
  %1136 = vmatprep.subr.mxu0 0.0
  %1137 = vmatpush1.msra.mxu0 %v697
  %1138 = vmatprep.subr.mxu0 0.0
  %1139 = vmatpush1.msra.mxu0 %v698
  %1140 = vmatprep.subr.mxu0 0.0
  %1141 = vmatpush1.msra.mxu0 %v699
  %1142 = vmatprep.subr.mxu0 0.0
  %1143 = vmatpush1.msra.mxu0 %v700
  %1144 = vmatprep.subr.mxu0 0.0
  %1145 = vmatpush1.msra.mxu0 %v701
  %1146 = vmatprep.subr.mxu0 0.0
  %1147 = vmatpush1.msra.mxu0 %v702
  %1148 = vmatprep.subr.mxu0 0.0
  %1149 = vmatpush1.msra.mxu0 %v703
  %1150 = vmatprep.subr.mxu0 0.0
  %1151 = vmatpush1.msra.mxu0 %v704
  %1152 = vmatprep.subr.mxu0 0.0
  %1153 = vmatpush1.msra.mxu0 %v705
  %1154 = vmatprep.subr.mxu0 0.0
  %1155 = vmatpush1.msra.mxu0 %v706
  %1156 = vmatprep.subr.mxu0 0.0
  %1157 = vmatpush1.msra.mxu0 %v707
  %1158 = vmatprep.subr.mxu0 0.0
  %1159 = vmatpush1.msra.mxu0 %v708
  %1160 = vmatprep.subr.mxu0 0.0
  %1161 = vmatpush1.msra.mxu0 %v709
  %1162 = vmatprep.subr.mxu0 0.0
  %1163 = vmatpush1.msra.mxu0 %v710
  %1164 = vmatprep.subr.mxu0 0.0
  %1165 = vmatpush1.msra.mxu0 %v711
  %1166 = vmatprep.subr.mxu0 0.0
  %1167 = vmatpush1.msra.mxu0 %v712
  %1168 = vmatprep.subr.mxu0 0.0
  %1169 = vmatpush1.msra.mxu0 %v713
  %1170 = vmatprep.subr.mxu0 0.0
  %1171 = vmatpush1.msra.mxu0 %v714
  %1172 = vmatprep.subr.mxu0 0.0
  %1173 = vmatpush1.msra.mxu0 %v715
  %1174 = vmatprep.subr.mxu0 0.0
  %1175 = vmatpush1.msra.mxu0 %v716
  %1176 = vmatprep.subr.mxu0 0.0
  %1177 = vmatpush1.msra.mxu0 %v717
  %1178 = vmatprep.subr.mxu0 0.0
  %1179 = vmatpush1.msra.mxu0 %v718
  %1180 = vmatprep.subr.mxu0 0.0
  %1181 = vmatpush1.msra.mxu0 %v719
  %1182 = vmatprep.subr.mxu0 0.0
  %1183 = vmatpush1.msra.mxu0 %v720
  %1184 = vmatprep.subr.mxu0 0.0
  %1185 = vmatpush1.msra.mxu0 %v721
  %1186 = vmatprep.subr.mxu0 0.0
  %1187 = vmatpush1.msra.mxu0 %v722
  %1188 = vmatprep.subr.mxu0 0.0
  %1189 = vmatpush1.msra.mxu0 %v723
  %1190 = vmatprep.subr.mxu0 0.0
  %1191 = vmatpush1.msra.mxu0 %v724
  %1192 = vmatprep.subr.mxu0 0.0
  %1193 = vmatpush1.msra.mxu0 %v725
  %1194 = vmatprep.subr.mxu0 0.0
  %1195 = vmatpush1.msra.mxu0 %v726
  %1196 = vmatprep.subr.mxu0 0.0
  %1197 = vmatpush1.msra.mxu0 %v727
  %1198 = vmatprep.mubr.f32.mxu0 %v642
  %1199 = vmatmul.mubr.f32.gmra.mrb[0].mxu0 %v641
  %v1200 = vpop.f32.mrb[0].mxu0
  %v1201 = vadd.f32 %v1131, %v1200
  %v1202 = vpop.f32.mrb[0].mxu0
  %1203 = vdwg.mxu0
  %1204 = vmatprep.subr.mxu0 0.0
  %1205 = vmatpush1.msra.mxu0 %v728
  %1206 = vmatprep.subr.mxu0 0.0
  %1207 = vmatpush1.msra.mxu0 %v729
  %1208 = vmatprep.subr.mxu0 0.0
  %1209 = vmatpush1.msra.mxu0 %v730
  %1210 = vmatprep.subr.mxu0 0.0
  %1211 = vmatpush1.msra.mxu0 %v731
  %1212 = vmatprep.subr.mxu0 0.0
  %1213 = vmatpush1.msra.mxu0 %v732
  %1214 = vmatprep.subr.mxu0 0.0
  %1215 = vmatpush1.msra.mxu0 %v733
  %1216 = vmatprep.subr.mxu0 0.0
  %1217 = vmatpush1.msra.mxu0 %v734
  %1218 = vmatprep.subr.mxu0 0.0
  %1219 = vmatpush1.msra.mxu0 %v735
  %1220 = vmatprep.subr.mxu0 0.0
  %1221 = vmatpush1.msra.mxu0 %v736
  %1222 = vmatprep.subr.mxu0 0.0
  %1223 = vmatpush1.msra.mxu0 %v737
  %1224 = vmatprep.subr.mxu0 0.0
  %1225 = vmatpush1.msra.mxu0 %v738
  %1226 = vmatprep.subr.mxu0 0.0
  %1227 = vmatpush1.msra.mxu0 %v739
  %1228 = vmatprep.subr.mxu0 0.0
  %1229 = vmatpush1.msra.mxu0 %v740
  %1230 = vmatprep.subr.mxu0 0.0
  %1231 = vmatpush1.msra.mxu0 %v741
  %1232 = vmatprep.subr.mxu0 0.0
  %1233 = vmatpush1.msra.mxu0 %v742
  %1234 = vmatprep.subr.mxu0 0.0
  %1235 = vmatpush1.msra.mxu0 %v743
  %1236 = vmatprep.subr.mxu0 0.0
  %1237 = vmatpush1.msra.mxu0 %v744
  %1238 = vmatprep.subr.mxu0 0.0
  %1239 = vmatpush1.msra.mxu0 %v745
  %1240 = vmatprep.subr.mxu0 0.0
  %1241 = vmatpush1.msra.mxu0 %v746
  %1242 = vmatprep.subr.mxu0 0.0
  %1243 = vmatpush1.msra.mxu0 %v747
  %1244 = vmatprep.subr.mxu0 0.0
  %1245 = vmatpush1.msra.mxu0 %v748
  %1246 = vmatprep.subr.mxu0 0.0
  %1247 = vmatpush1.msra.mxu0 %v749
  %1248 = vmatprep.subr.mxu0 0.0
  %1249 = vmatpush1.msra.mxu0 %v750
  %1250 = vmatprep.subr.mxu0 0.0
  %1251 = vmatpush1.msra.mxu0 %v751
  %1252 = vmatprep.subr.mxu0 0.0
  %1253 = vmatpush1.msra.mxu0 %v752
  %1254 = vmatprep.subr.mxu0 0.0
  %1255 = vmatpush1.msra.mxu0 %v753
  %1256 = vmatprep.subr.mxu0 0.0
  %1257 = vmatpush1.msra.mxu0 %v754
  %1258 = vmatprep.subr.mxu0 0.0
  %1259 = vmatpush1.msra.mxu0 %v755
  %1260 = vmatprep.subr.mxu0 0.0
  %1261 = vmatpush1.msra.mxu0 %v756
  %1262 = vmatprep.subr.mxu0 0.0
  %1263 = vmatpush1.msra.mxu0 %v757
  %1264 = vmatprep.subr.mxu0 0.0
  %1265 = vmatpush1.msra.mxu0 %v758
  %1266 = vmatprep.subr.mxu0 0.0
  %1267 = vmatpush1.msra.mxu0 %v759
  %1268 = vmatprep.mubr.f32.mxu0 %v644
  %1269 = vmatmul.mubr.f32.gmra.mrb[0].mxu0 %v643
  %v1270 = vpop.f32.mrb[0].mxu0
  %v1271 = vadd.f32 %v1201, %v1270
  %v1272 = vpop.f32.mrb[0].mxu0
  %1273 = vdwg.mxu0
  %1274 = vmatprep.subr.mxu0 0.0
  %1275 = vmatpush1.msra.mxu0 %v760
  %1276 = vmatprep.subr.mxu0 0.0
  %1277 = vmatpush1.msra.mxu0 %v761
  %1278 = vmatprep.subr.mxu0 0.0
  %1279 = vmatpush1.msra.mxu0 %v762
  %1280 = vmatprep.subr.mxu0 0.0
  %1281 = vmatpush1.msra.mxu0 %v763
  %1282 = vmatprep.subr.mxu0 0.0
  %1283 = vmatpush1.msra.mxu0 %v764
  %1284 = vmatprep.subr.mxu0 0.0
  %1285 = vmatpush1.msra.mxu0 %v765
  %1286 = vmatprep.subr.mxu0 0.0
  %1287 = vmatpush1.msra.mxu0 %v766
  %1288 = vmatprep.subr.mxu0 0.0
  %1289 = vmatpush1.msra.mxu0 %v767
  %1290 = vmatprep.subr.mxu0 0.0
  %1291 = vmatpush1.msra.mxu0 %v768
  %1292 = vmatprep.subr.mxu0 0.0
  %1293 = vmatpush1.msra.mxu0 %v769
  %1294 = vmatprep.subr.mxu0 0.0
  %1295 = vmatpush1.msra.mxu0 %v770
  %1296 = vmatprep.subr.mxu0 0.0
  %1297 = vmatpush1.msra.mxu0 %v771
  %1298 = vmatprep.subr.mxu0 0.0
  %1299 = vmatpush1.msra.mxu0 %v772
  %1300 = vmatprep.subr.mxu0 0.0
  %1301 = vmatpush1.msra.mxu0 %v773
  %1302 = vmatprep.subr.mxu0 0.0
  %1303 = vmatpush1.msra.mxu0 %v774
  %1304 = vmatprep.subr.mxu0 0.0
  %1305 = vmatpush1.msra.mxu0 %v775
  %1306 = vmatprep.subr.mxu0 0.0
  %1307 = vmatpush1.msra.mxu0 %v776
  %1308 = vmatprep.subr.mxu0 0.0
  %1309 = vmatpush1.msra.mxu0 %v777
  %1310 = vmatprep.subr.mxu0 0.0
  %1311 = vmatpush1.msra.mxu0 %v778
  %1312 = vmatprep.subr.mxu0 0.0
  %1313 = vmatpush1.msra.mxu0 %v779
  %1314 = vmatprep.subr.mxu0 0.0
  %1315 = vmatpush1.msra.mxu0 %v780
  %1316 = vmatprep.subr.mxu0 0.0
  %1317 = vmatpush1.msra.mxu0 %v781
  %1318 = vmatprep.subr.mxu0 0.0
  %1319 = vmatpush1.msra.mxu0 %v782
  %1320 = vmatprep.subr.mxu0 0.0
  %1321 = vmatpush1.msra.mxu0 %v783
  %1322 = vmatprep.subr.mxu0 0.0
  %1323 = vmatpush1.msra.mxu0 %v784
  %1324 = vmatprep.subr.mxu0 0.0
  %1325 = vmatpush1.msra.mxu0 %v785
  %1326 = vmatprep.subr.mxu0 0.0
  %1327 = vmatpush1.msra.mxu0 %v786
  %1328 = vmatprep.subr.mxu0 0.0
  %1329 = vmatpush1.msra.mxu0 %v787
  %1330 = vmatprep.subr.mxu0 0.0
  %1331 = vmatpush1.msra.mxu0 %v788
  %1332 = vmatprep.subr.mxu0 0.0
  %1333 = vmatpush1.msra.mxu0 %v789
  %1334 = vmatprep.subr.mxu0 0.0
  %1335 = vmatpush1.msra.mxu0 %v790
  %1336 = vmatprep.subr.mxu0 0.0
  %1337 = vmatpush1.msra.mxu0 %v791
  %1338 = vmatprep.mubr.f32.mxu0 %v646
  %1339 = vmatmul.mubr.f32.gmra.mrb[0].mxu0 %v645
  %v1340 = vpop.f32.mrb[0].mxu0
  %v1341 = vadd.f32 %v1271, %v1340
  %v1342 = vpop.f32.mrb[0].mxu0
  %1343 = vdwg.mxu0
  %1344 = vmatprep.subr.mxu0 0.0
  %1345 = vmatpush1.msra.mxu0 %v792
  %1346 = vmatprep.subr.mxu0 0.0
  %1347 = vmatpush1.msra.mxu0 %v793
  %1348 = vmatprep.subr.mxu0 0.0
  %1349 = vmatpush1.msra.mxu0 %v794
  %1350 = vmatprep.subr.mxu0 0.0
  %1351 = vmatpush1.msra.mxu0 %v795
  %1352 = vmatprep.subr.mxu0 0.0
  %1353 = vmatpush1.msra.mxu0 %v796
  %1354 = vmatprep.subr.mxu0 0.0
  %1355 = vmatpush1.msra.mxu0 %v797
  %1356 = vmatprep.subr.mxu0 0.0
  %1357 = vmatpush1.msra.mxu0 %v798
  %1358 = vmatprep.subr.mxu0 0.0
  %1359 = vmatpush1.msra.mxu0 %v799
  %1360 = vmatprep.subr.mxu0 0.0
  %1361 = vmatpush1.msra.mxu0 %v800
  %1362 = vmatprep.subr.mxu0 0.0
  %1363 = vmatpush1.msra.mxu0 %v801
  %1364 = vmatprep.subr.mxu0 0.0
  %1365 = vmatpush1.msra.mxu0 %v802
  %1366 = vmatprep.subr.mxu0 0.0
  %1367 = vmatpush1.msra.mxu0 %v803
  %1368 = vmatprep.subr.mxu0 0.0
  %1369 = vmatpush1.msra.mxu0 %v804
  %1370 = vmatprep.subr.mxu0 0.0
  %1371 = vmatpush1.msra.mxu0 %v805
  %1372 = vmatprep.subr.mxu0 0.0
  %1373 = vmatpush1.msra.mxu0 %v806
  %1374 = vmatprep.subr.mxu0 0.0
  %1375 = vmatpush1.msra.mxu0 %v807
  %1376 = vmatprep.subr.mxu0 0.0
  %1377 = vmatpush1.msra.mxu0 %v808
  %1378 = vmatprep.subr.mxu0 0.0
  %1379 = vmatpush1.msra.mxu0 %v809
  %1380 = vmatprep.subr.mxu0 0.0
  %1381 = vmatpush1.msra.mxu0 %v810
  %1382 = vmatprep.subr.mxu0 0.0
  %1383 = vmatpush1.msra.mxu0 %v811
  %1384 = vmatprep.subr.mxu0 0.0
  %1385 = vmatpush1.msra.mxu0 %v812
  %1386 = vmatprep.subr.mxu0 0.0
  %1387 = vmatpush1.msra.mxu0 %v813
  %1388 = vmatprep.subr.mxu0 0.0
  %1389 = vmatpush1.msra.mxu0 %v814
  %1390 = vmatprep.subr.mxu0 0.0
  %1391 = vmatpush1.msra.mxu0 %v815
  %1392 = vmatprep.subr.mxu0 0.0
  %1393 = vmatpush1.msra.mxu0 %v816
  %1394 = vmatprep.subr.mxu0 0.0
  %1395 = vmatpush1.msra.mxu0 %v817
  %1396 = vmatprep.subr.mxu0 0.0
  %1397 = vmatpush1.msra.mxu0 %v818
  %1398 = vmatprep.subr.mxu0 0.0
  %1399 = vmatpush1.msra.mxu0 %v819
  %1400 = vmatprep.subr.mxu0 0.0
  %1401 = vmatpush1.msra.mxu0 %v820
  %1402 = vmatprep.subr.mxu0 0.0
  %1403 = vmatpush1.msra.mxu0 %v821
  %1404 = vmatprep.subr.mxu0 0.0
  %1405 = vmatpush1.msra.mxu0 %v822
  %1406 = vmatprep.subr.mxu0 0.0
  %1407 = vmatpush1.msra.mxu0 %v823
  %1408 = vmatprep.mubr.f32.mxu0 %v648
  %1409 = vmatmul.mubr.f32.gmra.mrb[0].mxu0 %v647
  %v1410 = vpop.f32.mrb[0].mxu0
  %v1411 = vadd.f32 %v1341, %v1410
  %v1412 = vpop.f32.mrb[0].mxu0
  %1413 = vdwg.mxu0
  %1414 = vmatprep.subr.mxu0 0.0
  %1415 = vmatpush1.msra.mxu0 %v824
  %1416 = vmatprep.subr.mxu0 0.0
  %1417 = vmatpush1.msra.mxu0 %v825
  %1418 = vmatprep.subr.mxu0 0.0
  %1419 = vmatpush1.msra.mxu0 %v826
  %1420 = vmatprep.subr.mxu0 0.0
  %1421 = vmatpush1.msra.mxu0 %v827
  %1422 = vmatprep.subr.mxu0 0.0
  %1423 = vmatpush1.msra.mxu0 %v828
  %1424 = vmatprep.subr.mxu0 0.0
  %1425 = vmatpush1.msra.mxu0 %v829
  %1426 = vmatprep.subr.mxu0 0.0
  %1427 = vmatpush1.msra.mxu0 %v830
  %1428 = vmatprep.subr.mxu0 0.0
  %1429 = vmatpush1.msra.mxu0 %v831
  %1430 = vmatprep.subr.mxu0 0.0
  %1431 = vmatpush1.msra.mxu0 %v832
  %1432 = vmatprep.subr.mxu0 0.0
  %1433 = vmatpush1.msra.mxu0 %v833
  %1434 = vmatprep.subr.mxu0 0.0
  %1435 = vmatpush1.msra.mxu0 %v834
  %1436 = vmatprep.subr.mxu0 0.0
  %1437 = vmatpush1.msra.mxu0 %v835
  %1438 = vmatprep.subr.mxu0 0.0
  %1439 = vmatpush1.msra.mxu0 %v836
  %1440 = vmatprep.subr.mxu0 0.0
  %1441 = vmatpush1.msra.mxu0 %v837
  %1442 = vmatprep.subr.mxu0 0.0
  %1443 = vmatpush1.msra.mxu0 %v838
  %1444 = vmatprep.subr.mxu0 0.0
  %1445 = vmatpush1.msra.mxu0 %v839
  %1446 = vmatprep.subr.mxu0 0.0
  %1447 = vmatpush1.msra.mxu0 %v840
  %1448 = vmatprep.subr.mxu0 0.0
  %1449 = vmatpush1.msra.mxu0 %v841
  %1450 = vmatprep.subr.mxu0 0.0
  %1451 = vmatpush1.msra.mxu0 %v842
  %1452 = vmatprep.subr.mxu0 0.0
  %1453 = vmatpush1.msra.mxu0 %v843
  %1454 = vmatprep.subr.mxu0 0.0
  %1455 = vmatpush1.msra.mxu0 %v844
  %1456 = vmatprep.subr.mxu0 0.0
  %1457 = vmatpush1.msra.mxu0 %v845
  %1458 = vmatprep.subr.mxu0 0.0
  %1459 = vmatpush1.msra.mxu0 %v846
  %1460 = vmatprep.subr.mxu0 0.0
  %1461 = vmatpush1.msra.mxu0 %v847
  %1462 = vmatprep.subr.mxu0 0.0
  %1463 = vmatpush1.msra.mxu0 %v848
  %1464 = vmatprep.subr.mxu0 0.0
  %1465 = vmatpush1.msra.mxu0 %v849
  %1466 = vmatprep.subr.mxu0 0.0
  %1467 = vmatpush1.msra.mxu0 %v850
  %1468 = vmatprep.subr.mxu0 0.0
  %1469 = vmatpush1.msra.mxu0 %v851
  %1470 = vmatprep.subr.mxu0 0.0
  %1471 = vmatpush1.msra.mxu0 %v852
  %1472 = vmatprep.subr.mxu0 0.0
  %1473 = vmatpush1.msra.mxu0 %v853
  %1474 = vmatprep.subr.mxu0 0.0
  %1475 = vmatpush1.msra.mxu0 %v854
  %1476 = vmatprep.subr.mxu0 0.0
  %1477 = vmatpush1.msra.mxu0 %v855
  %1478 = vmatprep.mubr.f32.mxu0 %v650
  %1479 = vmatmul.mubr.f32.gmra.mrb[0].mxu0 %v649
  %v1480 = vpop.f32.mrb[0].mxu0
  %v1481 = vadd.f32 %v1411, %v1480
  %v1482 = vpop.f32.mrb[0].mxu0
  %1483 = vdwg.mxu0
  %1484 = vmatprep.subr.mxu0 0.0
  %1485 = vmatpush1.msra.mxu0 %v856
  %1486 = vmatprep.subr.mxu0 0.0
  %1487 = vmatpush1.msra.mxu0 %v857
  %1488 = vmatprep.subr.mxu0 0.0
  %1489 = vmatpush1.msra.mxu0 %v858
  %1490 = vmatprep.subr.mxu0 0.0
  %1491 = vmatpush1.msra.mxu0 %v859
  %1492 = vmatprep.subr.mxu0 0.0
  %1493 = vmatpush1.msra.mxu0 %v860
  %1494 = vmatprep.subr.mxu0 0.0
  %1495 = vmatpush1.msra.mxu0 %v861
  %1496 = vmatprep.subr.mxu0 0.0
  %1497 = vmatpush1.msra.mxu0 %v862
  %1498 = vmatprep.subr.mxu0 0.0
  %1499 = vmatpush1.msra.mxu0 %v863
  %1500 = vmatprep.subr.mxu0 0.0
  %1501 = vmatpush1.msra.mxu0 %v864
  %1502 = vmatprep.subr.mxu0 0.0
  %1503 = vmatpush1.msra.mxu0 %v865
  %1504 = vmatprep.subr.mxu0 0.0
  %1505 = vmatpush1.msra.mxu0 %v866
  %1506 = vmatprep.subr.mxu0 0.0
  %1507 = vmatpush1.msra.mxu0 %v867
  %1508 = vmatprep.subr.mxu0 0.0
  %1509 = vmatpush1.msra.mxu0 %v868
  %1510 = vmatprep.subr.mxu0 0.0
  %1511 = vmatpush1.msra.mxu0 %v869
  %1512 = vmatprep.subr.mxu0 0.0
  %1513 = vmatpush1.msra.mxu0 %v870
  %1514 = vmatprep.subr.mxu0 0.0
  %1515 = vmatpush1.msra.mxu0 %v871
  %1516 = vmatprep.subr.mxu0 0.0
  %1517 = vmatpush1.msra.mxu0 %v872
  %1518 = vmatprep.subr.mxu0 0.0
  %1519 = vmatpush1.msra.mxu0 %v873
  %1520 = vmatprep.subr.mxu0 0.0
  %1521 = vmatpush1.msra.mxu0 %v874
  %1522 = vmatprep.subr.mxu0 0.0
  %1523 = vmatpush1.msra.mxu0 %v875
  %1524 = vmatprep.subr.mxu0 0.0
  %1525 = vmatpush1.msra.mxu0 %v876
  %1526 = vmatprep.subr.mxu0 0.0
  %1527 = vmatpush1.msra.mxu0 %v877
  %1528 = vmatprep.subr.mxu0 0.0
  %1529 = vmatpush1.msra.mxu0 %v878
  %1530 = vmatprep.subr.mxu0 0.0
  %1531 = vmatpush1.msra.mxu0 %v879
  %1532 = vmatprep.subr.mxu0 0.0
  %1533 = vmatpush1.msra.mxu0 %v880
  %1534 = vmatprep.subr.mxu0 0.0
  %1535 = vmatpush1.msra.mxu0 %v881
  %1536 = vmatprep.subr.mxu0 0.0
  %1537 = vmatpush1.msra.mxu0 %v882
  %1538 = vmatprep.subr.mxu0 0.0
  %1539 = vmatpush1.msra.mxu0 %v883
  %1540 = vmatprep.subr.mxu0 0.0
  %1541 = vmatpush1.msra.mxu0 %v884
  %1542 = vmatprep.subr.mxu0 0.0
  %1543 = vmatpush1.msra.mxu0 %v885
  %1544 = vmatprep.subr.mxu0 0.0
  %1545 = vmatpush1.msra.mxu0 %v886
  %1546 = vmatprep.subr.mxu0 0.0
  %1547 = vmatpush1.msra.mxu0 %v887
  %1548 = vmatprep.mubr.f32.mxu0 %v652
  %1549 = vmatmul.mubr.f32.gmra.mrb[0].mxu0 %v651
  %v1550 = vpop.f32.mrb[0].mxu0
  %v1551 = vadd.f32 %v1481, %v1550
  %v1552 = vpop.f32.mrb[0].mxu0
  %1553 = vdwg.mxu0
  %1554 = vmatprep.subr.mxu0 0.0
  %1555 = vmatpush1.msra.mxu0 %v888
  %1556 = vmatprep.subr.mxu0 0.0
  %1557 = vmatpush1.msra.mxu0 %v889
  %1558 = vmatprep.subr.mxu0 0.0
  %1559 = vmatpush1.msra.mxu0 %v890
  %1560 = vmatprep.subr.mxu0 0.0
  %1561 = vmatpush1.msra.mxu0 %v891
  %1562 = vmatprep.subr.mxu0 0.0
  %1563 = vmatpush1.msra.mxu0 %v892
  %1564 = vmatprep.subr.mxu0 0.0
  %1565 = vmatpush1.msra.mxu0 %v893
  %1566 = vmatprep.subr.mxu0 0.0
  %1567 = vmatpush1.msra.mxu0 %v894
  %1568 = vmatprep.subr.mxu0 0.0
  %1569 = vmatpush1.msra.mxu0 %v895
  %1570 = vmatprep.subr.mxu0 0.0
  %1571 = vmatpush1.msra.mxu0 %v896
  %1572 = vmatprep.subr.mxu0 0.0
  %1573 = vmatpush1.msra.mxu0 %v897
  %1574 = vmatprep.subr.mxu0 0.0
  %1575 = vmatpush1.msra.mxu0 %v898
  %1576 = vmatprep.subr.mxu0 0.0
  %1577 = vmatpush1.msra.mxu0 %v899
  %1578 = vmatprep.subr.mxu0 0.0
  %1579 = vmatpush1.msra.mxu0 %v900
  %1580 = vmatprep.subr.mxu0 0.0
  %1581 = vmatpush1.msra.mxu0 %v901
  %1582 = vmatprep.subr.mxu0 0.0
  %1583 = vmatpush1.msra.mxu0 %v902
  %1584 = vmatprep.subr.mxu0 0.0
  %1585 = vmatpush1.msra.mxu0 %v903
  %1586 = vmatprep.subr.mxu0 0.0
  %1587 = vmatpush1.msra.mxu0 %v904
  %1588 = vmatprep.subr.mxu0 0.0
  %1589 = vmatpush1.msra.mxu0 %v905
  %1590 = vmatprep.subr.mxu0 0.0
  %1591 = vmatpush1.msra.mxu0 %v906
  %1592 = vmatprep.subr.mxu0 0.0
  %1593 = vmatpush1.msra.mxu0 %v907
  %1594 = vmatprep.subr.mxu0 0.0
  %1595 = vmatpush1.msra.mxu0 %v908
  %1596 = vmatprep.subr.mxu0 0.0
  %1597 = vmatpush1.msra.mxu0 %v909
  %1598 = vmatprep.subr.mxu0 0.0
  %1599 = vmatpush1.msra.mxu0 %v910
  %1600 = vmatprep.subr.mxu0 0.0
  %1601 = vmatpush1.msra.mxu0 %v911
  %1602 = vmatprep.subr.mxu0 0.0
  %1603 = vmatpush1.msra.mxu0 %v912
  %1604 = vmatprep.subr.mxu0 0.0
  %1605 = vmatpush1.msra.mxu0 %v913
  %1606 = vmatprep.subr.mxu0 0.0
  %1607 = vmatpush1.msra.mxu0 %v914
  %1608 = vmatprep.subr.mxu0 0.0
  %1609 = vmatpush1.msra.mxu0 %v915
  %1610 = vmatprep.subr.mxu0 0.0
  %1611 = vmatpush1.msra.mxu0 %v916
  %1612 = vmatprep.subr.mxu0 0.0
  %1613 = vmatpush1.msra.mxu0 %v917
  %1614 = vmatprep.subr.mxu0 0.0
  %1615 = vmatpush1.msra.mxu0 %v918
  %1616 = vmatprep.subr.mxu0 0.0
  %1617 = vmatpush1.msra.mxu0 %v919
  %1618 = vmatprep.mubr.f32.mxu0 %v654
  %1619 = vmatmul.mubr.f32.gmra.mrb[0].mxu0 %v653
  %v1620 = vpop.f32.mrb[0].mxu0
  %v1621 = vadd.f32 %v1551, %v1620
  %v1622 = vpop.f32.mrb[0].mxu0
  %1623 = vdwg.mxu0
  %1624 = vmatprep.subr.mxu0 0.0
  %1625 = vmatpush1.msra.mxu0 %v920
  %1626 = vmatprep.subr.mxu0 0.0
  %1627 = vmatpush1.msra.mxu0 %v921
  %1628 = vmatprep.subr.mxu0 0.0
  %1629 = vmatpush1.msra.mxu0 %v922
  %1630 = vmatprep.subr.mxu0 0.0
  %1631 = vmatpush1.msra.mxu0 %v923
  %1632 = vmatprep.subr.mxu0 0.0
  %1633 = vmatpush1.msra.mxu0 %v924
  %1634 = vmatprep.subr.mxu0 0.0
  %1635 = vmatpush1.msra.mxu0 %v925
  %1636 = vmatprep.subr.mxu0 0.0
  %1637 = vmatpush1.msra.mxu0 %v926
  %1638 = vmatprep.subr.mxu0 0.0
  %1639 = vmatpush1.msra.mxu0 %v927
  %1640 = vmatprep.subr.mxu0 0.0
  %1641 = vmatpush1.msra.mxu0 %v928
  %1642 = vmatprep.subr.mxu0 0.0
  %1643 = vmatpush1.msra.mxu0 %v929
  %1644 = vmatprep.subr.mxu0 0.0
  %1645 = vmatpush1.msra.mxu0 %v930
  %1646 = vmatprep.subr.mxu0 0.0
  %1647 = vmatpush1.msra.mxu0 %v931
  %1648 = vmatprep.subr.mxu0 0.0
  %1649 = vmatpush1.msra.mxu0 %v932
  %1650 = vmatprep.subr.mxu0 0.0
  %1651 = vmatpush1.msra.mxu0 %v933
  %1652 = vmatprep.subr.mxu0 0.0
  %1653 = vmatpush1.msra.mxu0 %v934
  %1654 = vmatprep.subr.mxu0 0.0
  %1655 = vmatpush1.msra.mxu0 %v935
  %1656 = vmatprep.subr.mxu0 0.0
  %1657 = vmatpush1.msra.mxu0 %v936
  %1658 = vmatprep.subr.mxu0 0.0
  %1659 = vmatpush1.msra.mxu0 %v937
  %1660 = vmatprep.subr.mxu0 0.0
  %1661 = vmatpush1.msra.mxu0 %v938
  %1662 = vmatprep.subr.mxu0 0.0
  %1663 = vmatpush1.msra.mxu0 %v939
  %1664 = vmatprep.subr.mxu0 0.0
  %1665 = vmatpush1.msra.mxu0 %v940
  %1666 = vmatprep.subr.mxu0 0.0
  %1667 = vmatpush1.msra.mxu0 %v941
  %1668 = vmatprep.subr.mxu0 0.0
  %1669 = vmatpush1.msra.mxu0 %v942
  %1670 = vmatprep.subr.mxu0 0.0
  %1671 = vmatpush1.msra.mxu0 %v943
  %1672 = vmatprep.subr.mxu0 0.0
  %1673 = vmatpush1.msra.mxu0 %v944
  %1674 = vmatprep.subr.mxu0 0.0
  %1675 = vmatpush1.msra.mxu0 %v945
  %1676 = vmatprep.subr.mxu0 0.0
  %1677 = vmatpush1.msra.mxu0 %v946
  %1678 = vmatprep.subr.mxu0 0.0
  %1679 = vmatpush1.msra.mxu0 %v947
  %1680 = vmatprep.subr.mxu0 0.0
  %1681 = vmatpush1.msra.mxu0 %v948
  %1682 = vmatprep.subr.mxu0 0.0
  %1683 = vmatpush1.msra.mxu0 %v949
  %1684 = vmatprep.subr.mxu0 0.0
  %1685 = vmatpush1.msra.mxu0 %v950
  %1686 = vmatprep.subr.mxu0 0.0
  %1687 = vmatpush1.msra.mxu0 %v951
  %1688 = vmatprep.mubr.f32.mxu0 %v656
  %1689 = vmatmul.mubr.f32.gmra.mrb[0].mxu0 %v655
  %v1690 = vpop.f32.mrb[0].mxu0
  %v1691 = vadd.f32 %v1621, %v1690
  %v1692 = vpop.f32.mrb[0].mxu0
  %1693 = vdwg.mxu0
  %1694 = vmatprep.subr.mxu0 0.0
  %1695 = vmatpush1.msra.mxu0 %v952
  %1696 = vmatprep.subr.mxu0 0.0
  %1697 = vmatpush1.msra.mxu0 %v953
  %1698 = vmatprep.subr.mxu0 0.0
  %1699 = vmatpush1.msra.mxu0 %v954
  %1700 = vmatprep.subr.mxu0 0.0
  %1701 = vmatpush1.msra.mxu0 %v955
  %1702 = vmatprep.subr.mxu0 0.0
  %1703 = vmatpush1.msra.mxu0 %v956
  %1704 = vmatprep.subr.mxu0 0.0
  %1705 = vmatpush1.msra.mxu0 %v957
  %1706 = vmatprep.subr.mxu0 0.0
  %1707 = vmatpush1.msra.mxu0 %v958
  %1708 = vmatprep.subr.mxu0 0.0
  %1709 = vmatpush1.msra.mxu0 %v959
  %1710 = vmatprep.subr.mxu0 0.0
  %1711 = vmatpush1.msra.mxu0 %v960
  %1712 = vmatprep.subr.mxu0 0.0
  %1713 = vmatpush1.msra.mxu0 %v961
  %1714 = vmatprep.subr.mxu0 0.0
  %1715 = vmatpush1.msra.mxu0 %v962
  %1716 = vmatprep.subr.mxu0 0.0
  %1717 = vmatpush1.msra.mxu0 %v963
  %1718 = vmatprep.subr.mxu0 0.0
  %1719 = vmatpush1.msra.mxu0 %v964
  %1720 = vmatprep.subr.mxu0 0.0
  %1721 = vmatpush1.msra.mxu0 %v965
  %1722 = vmatprep.subr.mxu0 0.0
  %1723 = vmatpush1.msra.mxu0 %v966
  %1724 = vmatprep.subr.mxu0 0.0
  %1725 = vmatpush1.msra.mxu0 %v967
  %1726 = vmatprep.subr.mxu0 0.0
  %1727 = vmatpush1.msra.mxu0 %v968
  %1728 = vmatprep.subr.mxu0 0.0
  %1729 = vmatpush1.msra.mxu0 %v969
  %1730 = vmatprep.subr.mxu0 0.0
  %1731 = vmatpush1.msra.mxu0 %v970
  %1732 = vmatprep.subr.mxu0 0.0
  %1733 = vmatpush1.msra.mxu0 %v971
  %1734 = vmatprep.subr.mxu0 0.0
  %1735 = vmatpush1.msra.mxu0 %v972
  %1736 = vmatprep.subr.mxu0 0.0
  %1737 = vmatpush1.msra.mxu0 %v973
  %1738 = vmatprep.subr.mxu0 0.0
  %1739 = vmatpush1.msra.mxu0 %v974
  %1740 = vmatprep.subr.mxu0 0.0
  %1741 = vmatpush1.msra.mxu0 %v975
  %1742 = vmatprep.subr.mxu0 0.0
  %1743 = vmatpush1.msra.mxu0 %v976
  %1744 = vmatprep.subr.mxu0 0.0
  %1745 = vmatpush1.msra.mxu0 %v977
  %1746 = vmatprep.subr.mxu0 0.0
  %1747 = vmatpush1.msra.mxu0 %v978
  %1748 = vmatprep.subr.mxu0 0.0
  %1749 = vmatpush1.msra.mxu0 %v979
  %1750 = vmatprep.subr.mxu0 0.0
  %1751 = vmatpush1.msra.mxu0 %v980
  %1752 = vmatprep.subr.mxu0 0.0
  %1753 = vmatpush1.msra.mxu0 %v981
  %1754 = vmatprep.subr.mxu0 0.0
  %1755 = vmatpush1.msra.mxu0 %v982
  %1756 = vmatprep.subr.mxu0 0.0
  %1757 = vmatpush1.msra.mxu0 %v983
  %1758 = vmatprep.mubr.f32.mxu0 %v658
  %1759 = vmatmul.mubr.f32.gmra.mrb[0].mxu0 %v657
  %v1760 = vpop.f32.mrb[0].mxu0
  %v1761 = vadd.f32 %v1691, %v1760
  %v1762 = vpop.f32.mrb[0].mxu0
  %1763 = vdwg.mxu0
  %1764 = vmatprep.subr.mxu0 0.0
  %1765 = vmatpush1.msra.mxu0 %v984
  %1766 = vmatprep.subr.mxu0 0.0
  %1767 = vmatpush1.msra.mxu0 %v985
  %1768 = vmatprep.subr.mxu0 0.0
  %1769 = vmatpush1.msra.mxu0 %v986
  %1770 = vmatprep.subr.mxu0 0.0
  %1771 = vmatpush1.msra.mxu0 %v987
  %1772 = vmatprep.subr.mxu0 0.0
  %1773 = vmatpush1.msra.mxu0 %v988
  %1774 = vmatprep.subr.mxu0 0.0
  %1775 = vmatpush1.msra.mxu0 %v989
  %1776 = vmatprep.subr.mxu0 0.0
  %1777 = vmatpush1.msra.mxu0 %v990
  %1778 = vmatprep.subr.mxu0 0.0
  %1779 = vmatpush1.msra.mxu0 %v991
  %1780 = vmatprep.subr.mxu0 0.0
  %1781 = vmatpush1.msra.mxu0 %v992
  %1782 = vmatprep.subr.mxu0 0.0
  %1783 = vmatpush1.msra.mxu0 %v993
  %1784 = vmatprep.subr.mxu0 0.0
  %1785 = vmatpush1.msra.mxu0 %v994
  %1786 = vmatprep.subr.mxu0 0.0
  %1787 = vmatpush1.msra.mxu0 %v995
  %1788 = vmatprep.subr.mxu0 0.0
  %1789 = vmatpush1.msra.mxu0 %v996
  %1790 = vmatprep.subr.mxu0 0.0
  %1791 = vmatpush1.msra.mxu0 %v997
  %1792 = vmatprep.subr.mxu0 0.0
  %1793 = vmatpush1.msra.mxu0 %v998
  %1794 = vmatprep.subr.mxu0 0.0
  %1795 = vmatpush1.msra.mxu0 %v999
  %1796 = vmatprep.subr.mxu0 0.0
  %1797 = vmatpush1.msra.mxu0 %v1000
  %1798 = vmatprep.subr.mxu0 0.0
  %1799 = vmatpush1.msra.mxu0 %v1001
  %1800 = vmatprep.subr.mxu0 0.0
  %1801 = vmatpush1.msra.mxu0 %v1002
  %1802 = vmatprep.subr.mxu0 0.0
  %1803 = vmatpush1.msra.mxu0 %v1003
  %1804 = vmatprep.subr.mxu0 0.0
  %1805 = vmatpush1.msra.mxu0 %v1004
  %1806 = vmatprep.subr.mxu0 0.0
  %1807 = vmatpush1.msra.mxu0 %v1005
  %1808 = vmatprep.subr.mxu0 0.0
  %1809 = vmatpush1.msra.mxu0 %v1006
  %1810 = vmatprep.subr.mxu0 0.0
  %1811 = vmatpush1.msra.mxu0 %v1007
  %1812 = vmatprep.subr.mxu0 0.0
  %1813 = vmatpush1.msra.mxu0 %v1008
  %1814 = vmatprep.subr.mxu0 0.0
  %1815 = vmatpush1.msra.mxu0 %v1009
  %1816 = vmatprep.subr.mxu0 0.0
  %1817 = vmatpush1.msra.mxu0 %v1010
  %1818 = vmatprep.subr.mxu0 0.0
  %1819 = vmatpush1.msra.mxu0 %v1011
  %1820 = vmatprep.subr.mxu0 0.0
  %1821 = vmatpush1.msra.mxu0 %v1012
  %1822 = vmatprep.subr.mxu0 0.0
  %1823 = vmatpush1.msra.mxu0 %v1013
  %1824 = vmatprep.subr.mxu0 0.0
  %1825 = vmatpush1.msra.mxu0 %v1014
  %1826 = vmatprep.subr.mxu0 0.0
  %1827 = vmatpush1.msra.mxu0 %v1015
  %1828 = vmatprep.mubr.f32.mxu0 %v660
  %1829 = vmatmul.mubr.f32.gmra.mrb[0].mxu0 %v659
  %v1830 = vpop.f32.mrb[0].mxu0
  %v1831 = vadd.f32 %v1761, %v1830
  %v1832 = vpop.f32.mrb[0].mxu0
  %1833 = vdwg.mxu0
  %1834 = vmatprep.subr.mxu0 0.0
  %1835 = vmatpush1.msra.mxu0 %v1016
  %1836 = vmatprep.subr.mxu0 0.0
  %1837 = vmatpush1.msra.mxu0 %v1017
  %1838 = vmatprep.subr.mxu0 0.0
  %1839 = vmatpush1.msra.mxu0 %v1018
  %1840 = vmatprep.subr.mxu0 0.0
  %1841 = vmatpush1.msra.mxu0 %v1019
  %1842 = vmatprep.subr.mxu0 0.0
  %1843 = vmatpush1.msra.mxu0 %v1020
  %1844 = vmatprep.subr.mxu0 0.0
  %1845 = vmatpush1.msra.mxu0 %v1021
  %1846 = vmatprep.subr.mxu0 0.0
  %1847 = vmatpush1.msra.mxu0 %v1022
  %1848 = vmatprep.subr.mxu0 0.0
  %1849 = vmatpush1.msra.mxu0 %v1023
  %1850 = vmatprep.subr.mxu0 0.0
  %1851 = vmatpush1.msra.mxu0 %v1024
  %1852 = vmatprep.subr.mxu0 0.0
  %1853 = vmatpush1.msra.mxu0 %v1025
  %1854 = vmatprep.subr.mxu0 0.0
  %1855 = vmatpush1.msra.mxu0 %v1026
  %1856 = vmatprep.subr.mxu0 0.0
  %1857 = vmatpush1.msra.mxu0 %v1027
  %1858 = vmatprep.subr.mxu0 0.0
  %1859 = vmatpush1.msra.mxu0 %v1028
  %1860 = vmatprep.subr.mxu0 0.0
  %1861 = vmatpush1.msra.mxu0 %v1029
  %1862 = vmatprep.subr.mxu0 0.0
  %1863 = vmatpush1.msra.mxu0 %v1030
  %1864 = vmatprep.subr.mxu0 0.0
  %1865 = vmatpush1.msra.mxu0 %v1031
  %1866 = vmatprep.subr.mxu0 0.0
  %1867 = vmatpush1.msra.mxu0 %v1032
  %1868 = vmatprep.subr.mxu0 0.0
  %1869 = vmatpush1.msra.mxu0 %v1033
  %1870 = vmatprep.subr.mxu0 0.0
  %1871 = vmatpush1.msra.mxu0 %v1034
  %1872 = vmatprep.subr.mxu0 0.0
  %1873 = vmatpush1.msra.mxu0 %v1035
  %1874 = vmatprep.subr.mxu0 0.0
  %1875 = vmatpush1.msra.mxu0 %v1036
  %1876 = vmatprep.subr.mxu0 0.0
  %1877 = vmatpush1.msra.mxu0 %v1037
  %1878 = vmatprep.subr.mxu0 0.0
  %1879 = vmatpush1.msra.mxu0 %v1038
  %1880 = vmatprep.subr.mxu0 0.0
  %1881 = vmatpush1.msra.mxu0 %v1039
  %1882 = vmatprep.subr.mxu0 0.0
  %1883 = vmatpush1.msra.mxu0 %v1040
  %1884 = vmatprep.subr.mxu0 0.0
  %1885 = vmatpush1.msra.mxu0 %v1041
  %1886 = vmatprep.subr.mxu0 0.0
  %1887 = vmatpush1.msra.mxu0 %v1042
  %1888 = vmatprep.subr.mxu0 0.0
  %1889 = vmatpush1.msra.mxu0 %v1043
  %1890 = vmatprep.subr.mxu0 0.0
  %1891 = vmatpush1.msra.mxu0 %v1044
  %1892 = vmatprep.subr.mxu0 0.0
  %1893 = vmatpush1.msra.mxu0 %v1045
  %1894 = vmatprep.subr.mxu0 0.0
  %1895 = vmatpush1.msra.mxu0 %v1046
  %1896 = vmatprep.subr.mxu0 0.0
  %1897 = vmatpush1.msra.mxu0 %v1047
  %1898 = vmatprep.mubr.f32.mxu0 %v662
  %1899 = vmatmul.mubr.f32.gmra.mrb[0].mxu0 %v661
  %v1900 = vpop.f32.mrb[0].mxu0
  %v1901 = vadd.f32 %v1831, %v1900
  %v1902 = vpop.f32.mrb[0].mxu0
  %1903 = vdwg.mxu0
  %1904 = vmatprep.subr.mxu0 0.0
  %1905 = vmatpush1.msra.mxu0 %v1048
  %1906 = vmatprep.subr.mxu0 0.0
  %1907 = vmatpush1.msra.mxu0 %v1049
  %1908 = vmatprep.subr.mxu0 0.0
  %1909 = vmatpush1.msra.mxu0 %v1050
  %1910 = vmatprep.subr.mxu0 0.0
  %1911 = vmatpush1.msra.mxu0 %v1051
  %1912 = vmatprep.subr.mxu0 0.0
  %1913 = vmatpush1.msra.mxu0 %v1052
  %1914 = vmatprep.subr.mxu0 0.0
  %1915 = vmatpush1.msra.mxu0 %v1053
  %1916 = vmatprep.subr.mxu0 0.0
  %1917 = vmatpush1.msra.mxu0 %v1054
  %1918 = vmatprep.subr.mxu0 0.0
  %1919 = vmatpush1.msra.mxu0 %v1055
  %1920 = vmatprep.subr.mxu0 0.0
  %1921 = vmatpush1.msra.mxu0 %v1056
  %1922 = vmatprep.subr.mxu0 0.0
  %1923 = vmatpush1.msra.mxu0 %v1057
  %1924 = vmatprep.subr.mxu0 0.0
  %1925 = vmatpush1.msra.mxu0 %v1058
  %1926 = vmatprep.subr.mxu0 0.0
  %1927 = vmatpush1.msra.mxu0 %v1059
  %1928 = vmatprep.subr.mxu0 0.0
  %1929 = vmatpush1.msra.mxu0 %v1060
  %1930 = vmatprep.subr.mxu0 0.0
  %1931 = vmatpush1.msra.mxu0 %v1061
  %1932 = vmatprep.subr.mxu0 0.0
  %1933 = vmatpush1.msra.mxu0 %v1062
  %1934 = vmatprep.subr.mxu0 0.0
  %1935 = vmatpush1.msra.mxu0 %v1063
  %1936 = vmatprep.subr.mxu0 0.0
  %1937 = vmatpush1.msra.mxu0 0.0
  %1938 = vmatprep.subr.mxu0 0.0
  %1939 = vmatpush1.msra.mxu0 0.0
  %1940 = vmatprep.subr.mxu0 0.0
  %1941 = vmatpush1.msra.mxu0 0.0
  %1942 = vmatprep.subr.mxu0 0.0
  %1943 = vmatpush1.msra.mxu0 0.0
  %1944 = vmatprep.subr.mxu0 0.0
  %1945 = vmatpush1.msra.mxu0 0.0
  %1946 = vmatprep.subr.mxu0 0.0
  %1947 = vmatpush1.msra.mxu0 0.0
  %1948 = vmatprep.subr.mxu0 0.0
  %1949 = vmatpush1.msra.mxu0 0.0
  %1950 = vmatprep.subr.mxu0 0.0
  %1951 = vmatpush1.msra.mxu0 0.0
  %1952 = vmatprep.subr.mxu0 0.0
  %1953 = vmatpush1.msra.mxu0 0.0
  %1954 = vmatprep.subr.mxu0 0.0
  %1955 = vmatpush1.msra.mxu0 0.0
  %1956 = vmatprep.subr.mxu0 0.0
  %1957 = vmatpush1.msra.mxu0 0.0
  %1958 = vmatprep.subr.mxu0 0.0
  %1959 = vmatpush1.msra.mxu0 0.0
  %1960 = vmatprep.subr.mxu0 0.0
  %1961 = vmatpush1.msra.mxu0 0.0
  %1962 = vmatprep.subr.mxu0 0.0
  %1963 = vmatpush1.msra.mxu0 0.0
  %1964 = vmatprep.subr.mxu0 0.0
  %1965 = vmatpush1.msra.mxu0 0.0
  %1966 = vmatprep.subr.mxu0 0.0
  %1967 = vmatpush1.msra.mxu0 0.0
  %1968 = vmatprep.mubr.f32.mxu0 0.0
  %1969 = vmatmul.mubr.f32.gmra.mrb[0].mxu0 %v663
  %v1970 = vpop.f32.mrb[0].mxu0
  %v1971 = vadd.f32 %v1901, %v1970
  %v1972 = vpop.f32.mrb[0].mxu0
  %1973 = vdwg.mxu0
  %v1974 = vmax.f32 %v1971, 0.0
  %v1975 = vld [vmem:[%s4] sm:$0xff]
  %v1976 = vld [vmem:[%s4 + $0x8] sm:$0xff]
  %v1977 = vld [vmem:[%s4 + $0x10] sm:$0xff]
  %v1978 = vld [vmem:[%s4 + $0x18] sm:$0xff]
  %v1979 = vld [vmem:[%s4 + $0x20] sm:$0xff]
  %v1980 = vld [vmem:[%s4 + $0x28] sm:$0xff]
  %v1981 = vld [vmem:[%s4 + $0x30] sm:$0xff]
  %v1982 = vld [vmem:[%s4 + $0x38] sm:$0xff]
  %v1983 = vld [vmem:[%s4 + $0x40] sm:$0xff]
  %v1984 = vld [vmem:[%s4 + $0x48] sm:$0xff]
  %v1985 = vld [vmem:[%s4 + $0x50] sm:$0xff]
  %v1986 = vld [vmem:[%s4 + $0x58] sm:$0xff]
  %v1987 = vld [vmem:[%s4 + $0x60] sm:$0xff]
  %v1988 = vld [vmem:[%s4 + $0x68] sm:$0xff]
  %v1989 = vld [vmem:[%s4 + $0x70] sm:$0xff]
  %v1990 = vld [vmem:[%s4 + $0x78] sm:$0xff]
  %1991 = vmatprep.subr.mxu0 0.0
  %1992 = vmatpush1.msra.mxu0 %v1975
  %1993 = vmatprep.subr.mxu0 0.0
  %1994 = vmatpush1.msra.mxu0 %v1976
  %1995 = vmatprep.subr.mxu0 0.0
  %1996 = vmatpush1.msra.mxu0 %v1977
  %1997 = vmatprep.subr.mxu0 0.0
  %1998 = vmatpush1.msra.mxu0 %v1978
  %1999 = vmatprep.subr.mxu0 0.0
  %2000 = vmatpush1.msra.mxu0 %v1979
  %2001 = vmatprep.subr.mxu0 0.0
  %2002 = vmatpush1.msra.mxu0 %v1980
  %2003 = vmatprep.subr.mxu0 0.0
  %2004 = vmatpush1.msra.mxu0 %v1981
  %2005 = vmatprep.subr.mxu0 0.0
  %2006 = vmatpush1.msra.mxu0 %v1982
  %2007 = vmatprep.subr.mxu0 0.0
  %2008 = vmatpush1.msra.mxu0 %v1983
  %2009 = vmatprep.subr.mxu0 0.0
  %2010 = vmatpush1.msra.mxu0 %v1984
  %2011 = vmatprep.subr.mxu0 0.0
  %2012 = vmatpush1.msra.mxu0 %v1985
  %2013 = vmatprep.subr.mxu0 0.0
  %2014 = vmatpush1.msra.mxu0 %v1986
  %2015 = vmatprep.subr.mxu0 0.0
  %2016 = vmatpush1.msra.mxu0 %v1987
  %2017 = vmatprep.subr.mxu0 0.0
  %2018 = vmatpush1.msra.mxu0 %v1988
  %2019 = vmatprep.subr.mxu0 0.0
  %2020 = vmatpush1.msra.mxu0 %v1989
  %2021 = vmatprep.subr.mxu0 0.0
  %2022 = vmatpush1.msra.mxu0 %v1990
  %2023 = vmatprep.subr.mxu0 0.0
  %2024 = vmatpush1.msra.mxu0 0.0
  %2025 = vmatprep.subr.mxu0 0.0
  %2026 = vmatpush1.msra.mxu0 0.0
  %2027 = vmatprep.subr.mxu0 0.0
  %2028 = vmatpush1.msra.mxu0 0.0
  %2029 = vmatprep.subr.mxu0 0.0
  %2030 = vmatpush1.msra.mxu0 0.0
  %2031 = vmatprep.subr.mxu0 0.0
  %2032 = vmatpush1.msra.mxu0 0.0
  %2033 = vmatprep.subr.mxu0 0.0
  %2034 = vmatpush1.msra.mxu0 0.0
  %2035 = vmatprep.subr.mxu0 0.0
  %2036 = vmatpush1.msra.mxu0 0.0
  %2037 = vmatprep.subr.mxu0 0.0
  %2038 = vmatpush1.msra.mxu0 0.0
  %2039 = vmatprep.subr.mxu0 0.0
  %2040 = vmatpush1.msra.mxu0 0.0
  %2041 = vmatprep.subr.mxu0 0.0
  %2042 = vmatpush1.msra.mxu0 0.0
  %2043 = vmatprep.subr.mxu0 0.0
  %2044 = vmatpush1.msra.mxu0 0.0
  %2045 = vmatprep.subr.mxu0 0.0
  %2046 = vmatpush1.msra.mxu0 0.0
  %2047 = vmatprep.subr.mxu0 0.0
  %2048 = vmatpush1.msra.mxu0 0.0
  %2049 = vmatprep.subr.mxu0 0.0
  %2050 = vmatpush1.msra.mxu0 0.0
  %2051 = vmatprep.subr.mxu0 0.0
  %2052 = vmatpush1.msra.mxu0 0.0
  %2053 = vmatprep.subr.mxu0 0.0
  %2054 = vmatpush1.msra.mxu0 0.0
  %2055 = vmatprep.mubr.f32.mxu0 0.0
  %2056 = vmatmul.mubr.f32.gmra.mrb[0].mxu0 %v1974
  %v2057 = vpop.f32.mrb[0].mxu0
  %v2058 = vadd.f32 %v26, %v2057
  %v2059 = vpop.f32.mrb[0].mxu0
  %2060 = vdwg.mxu0
  %2061 = vst [vmem:[%s6] sm:$0xff] %v2058
  // Predicated region
  $region26: #{_top_forward_impl.1} parent=0 // pred_check
    _
  $region27: #{_top_forward_impl.1} parent=0 // pred_check_branch
    %2063 = sbr.rel (0) target = $region29
  $region28: #{_top_forward_impl.1} parent=0 // pred_region
    _
  $region29: #{_top_forward_impl.1} parent=0 // pred_fallthru
    _
  // Predicated region
  $region30: #{_top_forward_impl.1} parent=0 // pred_check
    _
  $region31: #{_top_forward_impl.1} parent=0 // pred_check_branch
    %2065 = sbr.rel (0) target = $region33
  $region32: #{_top_forward_impl.1} parent=0 // pred_region
    _
  $region33: #{_top_forward_impl.1} parent=0 // pred_fallthru
    _

</llo_original>
